<compile_context>
chip_gen: v7x
topology: tpu7x:2x2x1
jax: 0.10.0
libtpu: 0.0.40
codegen_flags: <defaults>
</compile_context>

<pallas_src>
import functools

import jax
import jax.numpy as jnp
from jax.experimental import pallas as pl
from jax.experimental.pallas import tpu as pltpu


HIDDEN_DIMS = [256, 128, 64]


# ---------------------------------------------------------------------------
# Fused Pallas kernel: h = x; for each layer: h = act(h @ W + b); out = h
# ---------------------------------------------------------------------------
def _fused_mlp_kernel(*refs, layout):
    """refs = (x_ref, bias_ref, wgroup_ref_0..wgroup_ref_{G-1}, o_ref).

    `layout` is a static tuple of per-layer records:
        (group_id, row_offset, in_dim, out_dim, bias_offset, activation)
    """
    x_ref = refs[0]
    b_ref = refs[1]
    o_ref = refs[-1]
    wg_refs = refs[2:-1]

    h = x_ref[...]                                        # [B, in] f32, stays in vregs
    for (gid, row_off, in_dim, out_dim, b_off, act) in layout:   # static unroll
        w = wg_refs[gid][pl.ds(row_off, in_dim), :]       # [in, out] bf16 (static view)
        b = b_ref[:, pl.ds(b_off, out_dim)]               # [1, out] f32 (static view)
        # bf16 operands -> MXU native path, f32 accumulation.
        y = jnp.dot(h.astype(jnp.bfloat16), w, preferred_element_type=jnp.float32)
        y = y + b                                         # f32 elementwise (VPU)
        if act == "relu":
            h = jnp.maximum(y, 0.0)
        elif act == "sigmoid":
            # numerically stable sigmoid, single approximate reciprocal on the EUP
            z = jnp.exp(-jnp.abs(y))
            r = pl.reciprocal(1.0 + z, approx=True)
            h = jnp.where(y >= 0.0, r, z * r)
        else:
            raise ValueError(f"unknown activation {act}")
    o_ref[...] = h.astype(o_ref.dtype)


def fused_forward(x, bias_buf, weight_groups, layout):
    """Single pallas_call running the whole layer stack with everything VMEM-resident."""
    out_dim = layout[-1][3]
    vmem = pl.BlockSpec(memory_space=pltpu.MemorySpace.VMEM)
    return pl.pallas_call(
        functools.partial(_fused_mlp_kernel, layout=layout),
        out_shape=jax.ShapeDtypeStruct((x.shape[0], out_dim), jnp.float32),
        in_specs=[vmem] * (2 + len(weight_groups)),
        out_specs=vmem,
    )(x, bias_buf, *weight_groups)


@functools.partial(jax.jit, static_argnames=("layout",))
def stacked_autoencoder_forward(x, bias_buf, weight_groups, layout):
    return fused_forward(x, bias_buf, weight_groups, layout)


# ---------------------------------------------------------------------------
# One-time parameter packing (done OUTSIDE jit / the kernel)
# ---------------------------------------------------------------------------
def pack_params(weights, biases, activations):
    """Pack layer params into few large buffers + a static per-layer layout.

    Returns:
      bias_buf:      [1, total_padded] f32, each bias at a 128-aligned lane offset.
      weight_groups: tuple of bf16 buffers; weights with equal out_dim are
                     row-concatenated (no padding).
      layout:        static tuple of (group_id, row_off, in_dim, out_dim, bias_off, act).
    """
    # --- group weights by output width (preserve first-seen order) ---
    group_cols = []
    group_members = {}
    for li, w in enumerate(weights):
        out = int(w.shape[1])
        if out not in group_members:
            group_members[out] = []
            group_cols.append(out)
        group_members[out].append(li)

    weight_groups = []
    layer_group = {}                       # layer idx -> (group_id, row_offset)
    for gid, out in enumerate(group_cols):
        rows, off = [], 0
        for li in group_members[out]:
            w = weights[li]
            layer_group[li] = (gid, off)
            rows.append(w.astype(jnp.bfloat16))     # pre-cast to bf16 HERE (not in-kernel)
            off += int(w.shape[0])
        weight_groups.append(jnp.concatenate(rows, axis=0))

    # --- concatenate biases along lanes, each starting at a 128-aligned offset ---
    bias_chunks, bias_offsets, off = [], [], 0
    for b in biases:
        out = int(b.shape[1])
        padded = ((out + 127) // 128) * 128
        bias_chunks.append(jnp.pad(b.astype(jnp.float32), ((0, 0), (0, padded - out))))
        bias_offsets.append(off)
        off += padded
    bias_buf = jnp.concatenate(bias_chunks, axis=1)

    layout = []
    for li, (w, act) in enumerate(zip(weights, activations)):
        gid, row_off = layer_group[li]
        layout.append((gid, int(row_off), int(w.shape[0]), int(w.shape[1]),
                       int(bias_offsets[li]), act))
    return bias_buf, tuple(weight_groups), tuple(layout)


# ---------------------------------------------------------------------------
# Parameter construction (deterministic, PyTorch-style uniform init)
# ---------------------------------------------------------------------------
def init_linear(key, in_dim, out_dim):
    kw, kb = jax.random.split(key)
    bound = 1.0 / jnp.sqrt(jnp.float32(in_dim))
    w = jax.random.uniform(kw, (in_dim, out_dim), jnp.float32, -bound, bound)
    b = jax.random.uniform(kb, (1, out_dim), jnp.float32, -bound, bound)
    return w, b


def build_params(key, input_dim, hidden_dims):
    # Layer dims mirror StackedAutoencoder exactly (incl. the 64->64 first decoder layer).
    dims, prev = [], input_dim
    for d in hidden_dims:                # encoder: Linear + ReLU
        dims.append((prev, d))
        prev = d
    for d in reversed(hidden_dims):      # decoder: Linear + ReLU
        dims.append((prev, d))
        prev = d
    dims.append((prev, input_dim))       # decoder_final + Sigmoid

    weights, biases = [], []
    for (in_dim, out_dim) in dims:
        key, sub = jax.random.split(key)
        w, b = init_linear(sub, in_dim, out_dim)
        weights.append(w)
        biases.append(b)
    return weights, biases


# ---------------------------------------------------------------------------
# Pure-JAX reference (f32) for a correctness check
# ---------------------------------------------------------------------------
def reference_forward(x, weights, biases):
    h = x
    n = len(weights)
    for i, (w, b) in enumerate(zip(weights, biases)):
        y = h @ w + b
        h = jax.nn.sigmoid(y) if i == n - 1 else jnp.maximum(y, 0.0)
    return h


if __name__ == "__main__":
    key = jax.random.PRNGKey(0)

    batch = 8
    input_dim = 512   # feature dimension of X (X.shape[1] in the reference)

    k_x, k_p = jax.random.split(key)
    x = jax.random.uniform(k_x, (batch, input_dim), jnp.float32)   # sigmoid-range data
    weights, biases = build_params(k_p, input_dim, HIDDEN_DIMS)

    n_layers = len(weights)
    activations = tuple(
        "relu" if i < n_layers - 1 else "sigmoid" for i in range(n_layers)
    )
    bias_buf, weight_groups, layout = pack_params(weights, biases, activations)

    out = stacked_autoencoder_forward(x, bias_buf, weight_groups, layout)
    out = jax.block_until_ready(out)

    assert out.shape == (batch, input_dim), out.shape
    assert out.dtype == jnp.float32
    assert bool(jnp.all(jnp.isfinite(out)))
    # sigmoid output must lie in [0, 1]
    assert bool(jnp.all(out >= 0.0)) and bool(jnp.all(out <= 1.0))

    # numerical check vs f32 reference (bf16 matmul operands -> modest tolerance)
    ref = reference_forward(x, weights, biases)
    assert bool(jnp.allclose(out, ref, rtol=5e-2, atol=5e-2)), float(
        jnp.max(jnp.abs(out - ref))
    )

    print("KERNEL_OK")
</pallas_src>

<mosaic_0001>
module attributes {stable_mosaic.version = 11 : i64} {
  func.func @_fused_mlp_kernel(%arg0: memref<8x512xf32, #tpu.memory_space<vmem>>, %arg1: memref<1x1536xf32, #tpu.memory_space<vmem>>, %arg2: memref<640x256xbf16, #tpu.memory_space<vmem>>, %arg3: memref<320x128xbf16, #tpu.memory_space<vmem>>, %arg4: memref<192x64xbf16, #tpu.memory_space<vmem>>, %arg5: memref<256x512xbf16, #tpu.memory_space<vmem>>, %arg6: memref<8x512xf32, #tpu.memory_space<vmem>>) attributes {dimension_semantics = [], scalar_prefetch = 0 : i64, scratch_operands = 0 : i64, tpu.core_type = #tpu.core_type<tc>} {
    %c0 = arith.constant 0 : index
    %c0_0 = arith.constant 0 : index
    %0 = vector.load %arg0[%c0, %c0_0] : memref<8x512xf32, #tpu.memory_space<vmem>>, vector<8x512xf32>
    %c0_1 = arith.constant 0 : index
    %c0_2 = arith.constant 0 : index
    %1 = vector.load %arg2[%c0_1, %c0_2] : memref<640x256xbf16, #tpu.memory_space<vmem>>, vector<512x256xbf16>
    %c0_3 = arith.constant 0 : index
    %c0_4 = arith.constant 0 : index
    %2 = vector.load %arg1[%c0_3, %c0_4] : memref<1x1536xf32, #tpu.memory_space<vmem>>, vector<1x256xf32>
    %3 = arith.truncf %0 : vector<8x512xf32> to vector<8x512xbf16>
    %cst = arith.constant dense<0.000000e+00> : vector<8x256xf32>
    %4 = tpu.matmul %3, %1, %cst {dimension_numbers = #tpu.dot_dimension_numbers<[1], [0], [0], [1], [0, 0, 1, 1], [], []>} : vector<8x512xbf16>, vector<512x256xbf16>, vector<8x256xf32> -> vector<8x256xf32>
    %5 = vector.broadcast %2 : vector<1x256xf32> to vector<8x256xf32>
    %6 = arith.addf %4, %5 : vector<8x256xf32>
    %cst_5 = arith.constant 0.000000e+00 : f32
    %7 = vector.broadcast %cst_5 : f32 to vector<8x256xf32>
    %8 = arith.maximumf %6, %7 : vector<8x256xf32>
    %c0_6 = arith.constant 0 : index
    %c0_7 = arith.constant 0 : index
    %9 = vector.load %arg3[%c0_6, %c0_7] : memref<320x128xbf16, #tpu.memory_space<vmem>>, vector<256x128xbf16>
    %c0_8 = arith.constant 0 : index
    %c256 = arith.constant 256 : index
    %10 = vector.load %arg1[%c0_8, %c256] : memref<1x1536xf32, #tpu.memory_space<vmem>>, vector<1x128xf32>
    %11 = arith.truncf %8 : vector<8x256xf32> to vector<8x256xbf16>
    %cst_9 = arith.constant dense<0.000000e+00> : vector<8x128xf32>
    %12 = tpu.matmul %11, %9, %cst_9 {dimension_numbers = #tpu.dot_dimension_numbers<[1], [0], [0], [1], [0, 0, 1, 1], [], []>} : vector<8x256xbf16>, vector<256x128xbf16>, vector<8x128xf32> -> vector<8x128xf32>
    %13 = vector.broadcast %10 : vector<1x128xf32> to vector<8x128xf32>
    %14 = arith.addf %12, %13 : vector<8x128xf32>
    %cst_10 = arith.constant 0.000000e+00 : f32
    %15 = vector.broadcast %cst_10 : f32 to vector<8x128xf32>
    %16 = arith.maximumf %14, %15 : vector<8x128xf32>
    %c0_11 = arith.constant 0 : index
    %c0_12 = arith.constant 0 : index
    %17 = vector.load %arg4[%c0_11, %c0_12] : memref<192x64xbf16, #tpu.memory_space<vmem>>, vector<128x64xbf16>
    %c0_13 = arith.constant 0 : index
    %c384 = arith.constant 384 : index
    %18 = vector.load %arg1[%c0_13, %c384] : memref<1x1536xf32, #tpu.memory_space<vmem>>, vector<1x64xf32>
    %19 = arith.truncf %16 : vector<8x128xf32> to vector<8x128xbf16>
    %cst_14 = arith.constant dense<0.000000e+00> : vector<8x64xf32>
    %20 = tpu.matmul %19, %17, %cst_14 {dimension_numbers = #tpu.dot_dimension_numbers<[1], [0], [0], [1], [0, 0, 1, 1], [], []>} : vector<8x128xbf16>, vector<128x64xbf16>, vector<8x64xf32> -> vector<8x64xf32>
    %21 = vector.broadcast %18 : vector<1x64xf32> to vector<8x64xf32>
    %22 = arith.addf %20, %21 : vector<8x64xf32>
    %cst_15 = arith.constant 0.000000e+00 : f32
    %23 = vector.broadcast %cst_15 : f32 to vector<8x64xf32>
    %24 = arith.maximumf %22, %23 : vector<8x64xf32>
    %c128 = arith.constant 128 : index
    %c0_16 = arith.constant 0 : index
    %25 = vector.load %arg4[%c128, %c0_16] : memref<192x64xbf16, #tpu.memory_space<vmem>>, vector<64x64xbf16>
    %c0_17 = arith.constant 0 : index
    %c512 = arith.constant 512 : index
    %26 = vector.load %arg1[%c0_17, %c512] : memref<1x1536xf32, #tpu.memory_space<vmem>>, vector<1x64xf32>
    %27 = arith.truncf %24 : vector<8x64xf32> to vector<8x64xbf16>
    %cst_18 = arith.constant dense<0.000000e+00> : vector<8x64xf32>
    %28 = tpu.matmul %27, %25, %cst_18 {dimension_numbers = #tpu.dot_dimension_numbers<[1], [0], [0], [1], [0, 0, 1, 1], [], []>} : vector<8x64xbf16>, vector<64x64xbf16>, vector<8x64xf32> -> vector<8x64xf32>
    %29 = vector.broadcast %26 : vector<1x64xf32> to vector<8x64xf32>
    %30 = arith.addf %28, %29 : vector<8x64xf32>
    %cst_19 = arith.constant 0.000000e+00 : f32
    %31 = vector.broadcast %cst_19 : f32 to vector<8x64xf32>
    %32 = arith.maximumf %30, %31 : vector<8x64xf32>
    %c256_20 = arith.constant 256 : index
    %c0_21 = arith.constant 0 : index
    %33 = vector.load %arg3[%c256_20, %c0_21] : memref<320x128xbf16, #tpu.memory_space<vmem>>, vector<64x128xbf16>
    %c0_22 = arith.constant 0 : index
    %c640 = arith.constant 640 : index
    %34 = vector.load %arg1[%c0_22, %c640] : memref<1x1536xf32, #tpu.memory_space<vmem>>, vector<1x128xf32>
    %35 = arith.truncf %32 : vector<8x64xf32> to vector<8x64xbf16>
    %cst_23 = arith.constant dense<0.000000e+00> : vector<8x128xf32>
    %36 = tpu.matmul %35, %33, %cst_23 {dimension_numbers = #tpu.dot_dimension_numbers<[1], [0], [0], [1], [0, 0, 1, 1], [], []>} : vector<8x64xbf16>, vector<64x128xbf16>, vector<8x128xf32> -> vector<8x128xf32>
    %37 = vector.broadcast %34 : vector<1x128xf32> to vector<8x128xf32>
    %38 = arith.addf %36, %37 : vector<8x128xf32>
    %cst_24 = arith.constant 0.000000e+00 : f32
    %39 = vector.broadcast %cst_24 : f32 to vector<8x128xf32>
    %40 = arith.maximumf %38, %39 : vector<8x128xf32>
    %c512_25 = arith.constant 512 : index
    %c0_26 = arith.constant 0 : index
    %41 = vector.load %arg2[%c512_25, %c0_26] : memref<640x256xbf16, #tpu.memory_space<vmem>>, vector<128x256xbf16>
    %c0_27 = arith.constant 0 : index
    %c768 = arith.constant 768 : index
    %42 = vector.load %arg1[%c0_27, %c768] : memref<1x1536xf32, #tpu.memory_space<vmem>>, vector<1x256xf32>
    %43 = arith.truncf %40 : vector<8x128xf32> to vector<8x128xbf16>
    %cst_28 = arith.constant dense<0.000000e+00> : vector<8x256xf32>
    %44 = tpu.matmul %43, %41, %cst_28 {dimension_numbers = #tpu.dot_dimension_numbers<[1], [0], [0], [1], [0, 0, 1, 1], [], []>} : vector<8x128xbf16>, vector<128x256xbf16>, vector<8x256xf32> -> vector<8x256xf32>
    %45 = vector.broadcast %42 : vector<1x256xf32> to vector<8x256xf32>
    %46 = arith.addf %44, %45 : vector<8x256xf32>
    %cst_29 = arith.constant 0.000000e+00 : f32
    %47 = vector.broadcast %cst_29 : f32 to vector<8x256xf32>
    %48 = arith.maximumf %46, %47 : vector<8x256xf32>
    %c0_30 = arith.constant 0 : index
    %c0_31 = arith.constant 0 : index
    %49 = vector.load %arg5[%c0_30, %c0_31] : memref<256x512xbf16, #tpu.memory_space<vmem>>, vector<256x512xbf16>
    %c0_32 = arith.constant 0 : index
    %c1024 = arith.constant 1024 : index
    %50 = vector.load %arg1[%c0_32, %c1024] : memref<1x1536xf32, #tpu.memory_space<vmem>>, vector<1x512xf32>
    %51 = arith.truncf %48 : vector<8x256xf32> to vector<8x256xbf16>
    %cst_33 = arith.constant dense<0.000000e+00> : vector<8x512xf32>
    %52 = tpu.matmul %51, %49, %cst_33 {dimension_numbers = #tpu.dot_dimension_numbers<[1], [0], [0], [1], [0, 0, 1, 1], [], []>} : vector<8x256xbf16>, vector<256x512xbf16>, vector<8x512xf32> -> vector<8x512xf32>
    %53 = vector.broadcast %50 : vector<1x512xf32> to vector<8x512xf32>
    %54 = arith.addf %52, %53 : vector<8x512xf32>
    %55 = math.absf %54 : vector<8x512xf32>
    %cst_34 = arith.constant 0.000000e+00 : f32
    %56 = vector.broadcast %cst_34 : f32 to vector<8x512xf32>
    %57 = arith.subf %56, %55 : vector<8x512xf32>
    %58 = math.exp %57 : vector<8x512xf32>
    %cst_35 = arith.constant 1.000000e+00 : f32
    %59 = vector.broadcast %cst_35 : f32 to vector<8x512xf32>
    %60 = arith.addf %59, %58 : vector<8x512xf32>
    %61 = tpu.reciprocal %60 {approx = true} : vector<8x512xf32> -> vector<8x512xf32>
    %cst_36 = arith.constant 0.000000e+00 : f32
    %62 = vector.broadcast %cst_36 : f32 to vector<8x512xf32>
    %63 = arith.cmpf oge, %54, %62 : vector<8x512xf32>
    %64 = arith.mulf %58, %61 : vector<8x512xf32>
    %65 = arith.select %63, %61, %64 : vector<8x512xi1>, vector<8x512xf32>
    %c0_37 = arith.constant 0 : index
    %c0_38 = arith.constant 0 : index
    %66 = vector.load %arg6[%c0_37, %c0_38] : memref<8x512xf32, #tpu.memory_space<vmem>>, vector<8x512xf32>
    tpu.vector_store %arg6[%c0_37, %c0_38], %65 {strides = array<i32>} : memref<8x512xf32, #tpu.memory_space<vmem>>, vector<8x512xf32>,
    return
  }
}

</mosaic_0001>

<llo_original>
// kernel: stacked_autoencoder_forward.1
$region0: #{stacked_autoencoder_forward.1}
  #allocation0 [shape = 'u32[]', space=smem, size = 0x4, offset = 0x4, fixed_abs, tag = 'smem constant byte address 0x4 - core index']
  #allocation1 [shape = 'u32[144,128]{1,0:T(1,128)}', space=vmem, size = 0x12000, scoped, tag = 'internal scratch']
  %s0 = inlined_call_operand.hbm [shape: f32[8,512], index: 0, kind: input, shape index: {}]
  %s1 = inlined_call_operand.hbm [shape: f32[1,1536], index: 1, kind: input, shape index: {}]
  %s2 = inlined_call_operand.hbm [shape: bf16[640,256], index: 2, kind: input, shape index: {}]
  %s3 = inlined_call_operand.vmem [shape: bf16[320,128], index: 3, kind: input, shape index: {}]
  %s4 = inlined_call_operand.vmem [shape: bf16[192,64], index: 4, kind: input, shape index: {}]
  %s5 = inlined_call_operand.hbm [shape: bf16[256,512], index: 5, kind: input, shape index: {}]
  %s6 = inlined_call_operand.hbm [shape: f32[8,512], index: 6, kind: output, shape index: {}]
  %s7 = sld [smem:[#allocation0]]
  $region50: #{stacked_autoencoder_forward.1} parent=0
    _
  %s9 = ssub.s32 1, %s7
  %s10 = scalar_select 0, %s9, %s7
  $region1: #{stacked_autoencoder_forward.1} parent=0
    #allocation2 [shape = 'u8[16384]{0}', space=vmem, size = 0x4000, scoped, tag = 'input window, operand 0, single buffered']
    #allocation3 [shape = 's32[1]{0}', space=sflag, size = 0x4, scoped, tag = 'scoped memory for stacked_autoencoder_forward.1']
    #allocation4 [shape = 's32[1]{0}', space=sflag, size = 0x4, scoped, tag = 'scoped memory for stacked_autoencoder_forward.1']
    #allocation5 [shape = 'u8[6144]{0}', space=vmem, size = 0x1800, scoped, tag = 'input window, operand 1, single buffered']
    #allocation6 [shape = 's32[1]{0}', space=sflag, size = 0x4, scoped, tag = 'scoped memory for stacked_autoencoder_forward.1']
    #allocation7 [shape = 'u8[327680]{0}', space=vmem, size = 0x50000, scoped, tag = 'input window, operand 2, single buffered']
    #allocation8 [shape = 'u8[262144]{0}', space=vmem, size = 0x40000, scoped, tag = 'input window, operand 5, single buffered']
    #allocation9 [shape = 's32[1]{0}', space=sflag, size = 0x4, scoped, tag = 'scoped memory for stacked_autoencoder_forward.1']
    #allocation10 [shape = 'u8[16384]{0}', space=vmem, size = 0x4000, scoped, tag = 'output window, operand 0, single buffered']
    %11 = vsyncpa [#allocation3], 0
    %12 = vsyncpa [#allocation6], 0
    %13 = vsyncpa [#allocation9], 0
    %14 = vsyncpa [#allocation4], 0
    // Predicated region
    $region2: #{stacked_autoencoder_forward.1} parent=1 // pred_check
      _
    $region3: #{stacked_autoencoder_forward.1} parent=1 // pred_check_branch
      %16 = sbr.rel (0) target = $region5
    $region4: #{stacked_autoencoder_forward.1} parent=1 // pred_region
      %s18 = ssub.s32 512, 512
      %19 = vsyncadd [#allocation3], %s18
      %s21 = sshll.u32 [#allocation2], 4
      %s22 = int_to_ptr.vmem [resolvable:$true] %s21
      %24 = dma.hbm_to_vmem [thread:$0]  %s0, 512, %s22, [#allocation3]
    $region5: #{stacked_autoencoder_forward.1} parent=1 // pred_fallthru
      _
    // Predicated region
    $region6: #{stacked_autoencoder_forward.1} parent=1 // pred_check
      _
    $region7: #{stacked_autoencoder_forward.1} parent=1 // pred_check_branch
      %26 = sbr.rel (0) target = $region9
    $region8: #{stacked_autoencoder_forward.1} parent=1 // pred_region
      %s28 = ssub.s32 192, 192
      %29 = vsyncadd [#allocation6], %s28
      %s31 = sshll.u32 [#allocation5], 4
      %s32 = int_to_ptr.vmem [resolvable:$true] %s31
      %34 = dma.hbm_to_vmem [thread:$0]  %s1, 192, %s32, [#allocation6]
    $region9: #{stacked_autoencoder_forward.1} parent=1 // pred_fallthru
      _
    // Predicated region
    $region10: #{stacked_autoencoder_forward.1} parent=1 // pred_check
      _
    $region11: #{stacked_autoencoder_forward.1} parent=1 // pred_check_branch
      %36 = sbr.rel (0) target = $region13
    $region12: #{stacked_autoencoder_forward.1} parent=1 // pred_region
      %s38 = ssub.s32 10240, 10240
      %39 = vsyncadd [#allocation6], %s38
      %s40 = sshll.u32 [#allocation7], 4
      %s41 = int_to_ptr.vmem [resolvable:$true] %s40
      %46 = dma.hbm_to_vmem [thread:$0]  %s2, 10240, %s41, [#allocation6], 128, 128, 8
    $region13: #{stacked_autoencoder_forward.1} parent=1 // pred_fallthru
      _
    // Predicated region
    $region14: #{stacked_autoencoder_forward.1} parent=1 // pred_check
      _
    $region15: #{stacked_autoencoder_forward.1} parent=1 // pred_check_branch
      %48 = sbr.rel (0) target = $region17
    $region16: #{stacked_autoencoder_forward.1} parent=1 // pred_region
      _
    $region17: #{stacked_autoencoder_forward.1} parent=1 // pred_fallthru
      _
    // Predicated region
    $region18: #{stacked_autoencoder_forward.1} parent=1 // pred_check
      _
    $region19: #{stacked_autoencoder_forward.1} parent=1 // pred_check_branch
      %50 = sbr.rel (0) target = $region21
    $region20: #{stacked_autoencoder_forward.1} parent=1 // pred_region
      _
    $region21: #{stacked_autoencoder_forward.1} parent=1 // pred_fallthru
      _
    // Predicated region
    $region22: #{stacked_autoencoder_forward.1} parent=1 // pred_check
      _
    $region23: #{stacked_autoencoder_forward.1} parent=1 // pred_check_branch
      %52 = sbr.rel (0) target = $region25
    $region24: #{stacked_autoencoder_forward.1} parent=1 // pred_region
      %s54 = ssub.s32 8192, 8192
      %55 = vsyncadd [#allocation9], %s54
      %s56 = sshll.u32 [#allocation8], 4
      %s57 = int_to_ptr.vmem [resolvable:$true] %s56
      %62 = dma.hbm_to_vmem [thread:$0]  %s5, 8192, %s57, [#allocation9], 256, 256, 16
    $region25: #{stacked_autoencoder_forward.1} parent=1 // pred_fallthru
      _
    // Predicated region
    $region26: #{stacked_autoencoder_forward.1} parent=1 // pred_check
      _
    $region27: #{stacked_autoencoder_forward.1} parent=1 // pred_check_branch
      %64 = sbr.rel (0) target = $region29
    $region28: #{stacked_autoencoder_forward.1} parent=1 // pred_region
      %65 = dma.done [#allocation3], 512
    $region29: #{stacked_autoencoder_forward.1} parent=1 // pred_fallthru
      _
    // Predicated region
    $region30: #{stacked_autoencoder_forward.1} parent=1 // pred_check
      _
    $region31: #{stacked_autoencoder_forward.1} parent=1 // pred_check_branch
      %67 = sbr.rel (0) target = $region33
    $region32: #{stacked_autoencoder_forward.1} parent=1 // pred_region
      %68 = dma.done [#allocation6], 192
    $region33: #{stacked_autoencoder_forward.1} parent=1 // pred_fallthru
      _
    // Predicated region
    $region34: #{stacked_autoencoder_forward.1} parent=1 // pred_check
      _
    $region35: #{stacked_autoencoder_forward.1} parent=1 // pred_check_branch
      %70 = sbr.rel (0) target = $region37
    $region36: #{stacked_autoencoder_forward.1} parent=1 // pred_region
      %71 = dma.done [#allocation6], 10240
    $region37: #{stacked_autoencoder_forward.1} parent=1 // pred_fallthru
      _
    // Predicated region
    $region38: #{stacked_autoencoder_forward.1} parent=1 // pred_check
      _
    $region39: #{stacked_autoencoder_forward.1} parent=1 // pred_check_branch
      %73 = sbr.rel (0) target = $region41
    $region40: #{stacked_autoencoder_forward.1} parent=1 // pred_region
      %74 = dma.done [#allocation9], 8192
    $region41: #{stacked_autoencoder_forward.1} parent=1 // pred_fallthru
      _
    %v76 = vld [vmem:[#allocation2] sm:$0xff]
    %v77 = vld [vmem:[#allocation2 + $0x8] sm:$0xff]
    %v78 = vld [vmem:[#allocation2 + $0x10] sm:$0xff]
    %v79 = vld [vmem:[#allocation2 + $0x18] sm:$0xff]
    %v80 = vld [vmem:[#allocation7] sm:$0xff]
    %v81 = vld [vmem:[#allocation7 + $0x8] sm:$0xff]
    %v82 = vld [vmem:[#allocation7 + $0x10] sm:$0xff]
    %v83 = vld [vmem:[#allocation7 + $0x18] sm:$0xff]
    %v84 = vld [vmem:[#allocation7 + $0x20] sm:$0xff]
    %v85 = vld [vmem:[#allocation7 + $0x28] sm:$0xff]
    %v86 = vld [vmem:[#allocation7 + $0x30] sm:$0xff]
    %v87 = vld [vmem:[#allocation7 + $0x38] sm:$0xff]
    %v88 = vld [vmem:[#allocation7 + $0x40] sm:$0xff]
    %v89 = vld [vmem:[#allocation7 + $0x48] sm:$0xff]
    %v90 = vld [vmem:[#allocation7 + $0x50] sm:$0xff]
    %v91 = vld [vmem:[#allocation7 + $0x58] sm:$0xff]
    %v92 = vld [vmem:[#allocation7 + $0x60] sm:$0xff]
    %v93 = vld [vmem:[#allocation7 + $0x68] sm:$0xff]
    %v94 = vld [vmem:[#allocation7 + $0x70] sm:$0xff]
    %v95 = vld [vmem:[#allocation7 + $0x78] sm:$0xff]
    %v96 = vld [vmem:[#allocation7 + $0x80] sm:$0xff]
    %v97 = vld [vmem:[#allocation7 + $0x88] sm:$0xff]
    %v98 = vld [vmem:[#allocation7 + $0x90] sm:$0xff]
    %v99 = vld [vmem:[#allocation7 + $0x98] sm:$0xff]
    %v100 = vld [vmem:[#allocation7 + $0xa0] sm:$0xff]
    %v101 = vld [vmem:[#allocation7 + $0xa8] sm:$0xff]
    %v102 = vld [vmem:[#allocation7 + $0xb0] sm:$0xff]
    %v103 = vld [vmem:[#allocation7 + $0xb8] sm:$0xff]
    %v104 = vld [vmem:[#allocation7 + $0xc0] sm:$0xff]
    %v105 = vld [vmem:[#allocation7 + $0xc8] sm:$0xff]
    %v106 = vld [vmem:[#allocation7 + $0xd0] sm:$0xff]
    %v107 = vld [vmem:[#allocation7 + $0xd8] sm:$0xff]
    %v108 = vld [vmem:[#allocation7 + $0xe0] sm:$0xff]
    %v109 = vld [vmem:[#allocation7 + $0xe8] sm:$0xff]
    %v110 = vld [vmem:[#allocation7 + $0xf0] sm:$0xff]
    %v111 = vld [vmem:[#allocation7 + $0xf8] sm:$0xff]
    %v112 = vld [vmem:[#allocation7 + $0x100] sm:$0xff]
    %v113 = vld [vmem:[#allocation7 + $0x108] sm:$0xff]
    %v114 = vld [vmem:[#allocation7 + $0x110] sm:$0xff]
    %v115 = vld [vmem:[#allocation7 + $0x118] sm:$0xff]
    %v116 = vld [vmem:[#allocation7 + $0x120] sm:$0xff]
    %v117 = vld [vmem:[#allocation7 + $0x128] sm:$0xff]
    %v118 = vld [vmem:[#allocation7 + $0x130] sm:$0xff]
    %v119 = vld [vmem:[#allocation7 + $0x138] sm:$0xff]
    %v120 = vld [vmem:[#allocation7 + $0x140] sm:$0xff]
    %v121 = vld [vmem:[#allocation7 + $0x148] sm:$0xff]
    %v122 = vld [vmem:[#allocation7 + $0x150] sm:$0xff]
    %v123 = vld [vmem:[#allocation7 + $0x158] sm:$0xff]
    %v124 = vld [vmem:[#allocation7 + $0x160] sm:$0xff]
    %v125 = vld [vmem:[#allocation7 + $0x168] sm:$0xff]
    %v126 = vld [vmem:[#allocation7 + $0x170] sm:$0xff]
    %v127 = vld [vmem:[#allocation7 + $0x178] sm:$0xff]
    %v128 = vld [vmem:[#allocation7 + $0x180] sm:$0xff]
    %v129 = vld [vmem:[#allocation7 + $0x188] sm:$0xff]
    %v130 = vld [vmem:[#allocation7 + $0x190] sm:$0xff]
    %v131 = vld [vmem:[#allocation7 + $0x198] sm:$0xff]
    %v132 = vld [vmem:[#allocation7 + $0x1a0] sm:$0xff]
    %v133 = vld [vmem:[#allocation7 + $0x1a8] sm:$0xff]
    %v134 = vld [vmem:[#allocation7 + $0x1b0] sm:$0xff]
    %v135 = vld [vmem:[#allocation7 + $0x1b8] sm:$0xff]
    %v136 = vld [vmem:[#allocation7 + $0x1c0] sm:$0xff]
    %v137 = vld [vmem:[#allocation7 + $0x1c8] sm:$0xff]
    %v138 = vld [vmem:[#allocation7 + $0x1d0] sm:$0xff]
    %v139 = vld [vmem:[#allocation7 + $0x1d8] sm:$0xff]
    %v140 = vld [vmem:[#allocation7 + $0x1e0] sm:$0xff]
    %v141 = vld [vmem:[#allocation7 + $0x1e8] sm:$0xff]
    %v142 = vld [vmem:[#allocation7 + $0x1f0] sm:$0xff]
    %v143 = vld [vmem:[#allocation7 + $0x1f8] sm:$0xff]
    %v144 = vld [vmem:[#allocation5] sm:$0x3]
    %v145 = vpack.c.bf16 %v76, %v76
    %v146 = vpack.c.bf16 %v77, %v77
    %v147 = vpack.c.bf16 %v78, %v78
    %v148 = vpack.c.bf16 %v79, %v79
    %v150 = vlaneseq
    %v151 = vshrl.u32 %v150, 7
    %v152 = vsub.s32 0, %v151
    %v153 = vrot.slane %v144, %v152
    %v154 = vlaneseq
    %v155 = vshrl.u32 %v154, 7
    %v156 = vsub.s32 1, %v155
    %v157 = vrot.slane %v144, %v156
    %v224 = vunpack.c.l.b16 %v80
    %v225 = vunpack.c.h.b16 %v80
    %v226 = vunpack.c.l.b16 %v81
    %v227 = vunpack.c.h.b16 %v81
    %v228 = vunpack.c.l.b16 %v82
    %v229 = vunpack.c.h.b16 %v82
    %v230 = vunpack.c.l.b16 %v83
    %v231 = vunpack.c.h.b16 %v83
    %v232 = vunpack.c.l.b16 %v84
    %v233 = vunpack.c.h.b16 %v84
    %v234 = vunpack.c.l.b16 %v85
    %v235 = vunpack.c.h.b16 %v85
    %v236 = vunpack.c.l.b16 %v86
    %v237 = vunpack.c.h.b16 %v86
    %v238 = vunpack.c.l.b16 %v87
    %v239 = vunpack.c.h.b16 %v87
    %v240 = vunpack.c.l.b16 %v88
    %v241 = vunpack.c.h.b16 %v88
    %v242 = vunpack.c.l.b16 %v89
    %v243 = vunpack.c.h.b16 %v89
    %v244 = vunpack.c.l.b16 %v90
    %v245 = vunpack.c.h.b16 %v90
    %v246 = vunpack.c.l.b16 %v91
    %v247 = vunpack.c.h.b16 %v91
    %v248 = vunpack.c.l.b16 %v92
    %v249 = vunpack.c.h.b16 %v92
    %v250 = vunpack.c.l.b16 %v93
    %v251 = vunpack.c.h.b16 %v93
    %v252 = vunpack.c.l.b16 %v94
    %v253 = vunpack.c.h.b16 %v94
    %v254 = vunpack.c.l.b16 %v95
    %v255 = vunpack.c.h.b16 %v95
    %v256 = vunpack.c.l.b16 %v96
    %v257 = vunpack.c.h.b16 %v96
    %v258 = vunpack.c.l.b16 %v97
    %v259 = vunpack.c.h.b16 %v97
    %v260 = vunpack.c.l.b16 %v98
    %v261 = vunpack.c.h.b16 %v98
    %v262 = vunpack.c.l.b16 %v99
    %v263 = vunpack.c.h.b16 %v99
    %v264 = vunpack.c.l.b16 %v100
    %v265 = vunpack.c.h.b16 %v100
    %v266 = vunpack.c.l.b16 %v101
    %v267 = vunpack.c.h.b16 %v101
    %v268 = vunpack.c.l.b16 %v102
    %v269 = vunpack.c.h.b16 %v102
    %v270 = vunpack.c.l.b16 %v103
    %v271 = vunpack.c.h.b16 %v103
    %v272 = vunpack.c.l.b16 %v104
    %v273 = vunpack.c.h.b16 %v104
    %v274 = vunpack.c.l.b16 %v105
    %v275 = vunpack.c.h.b16 %v105
    %v276 = vunpack.c.l.b16 %v106
    %v277 = vunpack.c.h.b16 %v106
    %v278 = vunpack.c.l.b16 %v107
    %v279 = vunpack.c.h.b16 %v107
    %v280 = vunpack.c.l.b16 %v108
    %v281 = vunpack.c.h.b16 %v108
    %v282 = vunpack.c.l.b16 %v109
    %v283 = vunpack.c.h.b16 %v109
    %v284 = vunpack.c.l.b16 %v110
    %v285 = vunpack.c.h.b16 %v110
    %v286 = vunpack.c.l.b16 %v111
    %v287 = vunpack.c.h.b16 %v111
    %v288 = vunpack.c.l.b16 %v112
    %v289 = vunpack.c.h.b16 %v112
    %v290 = vunpack.c.l.b16 %v113
    %v291 = vunpack.c.h.b16 %v113
    %v292 = vunpack.c.l.b16 %v114
    %v293 = vunpack.c.h.b16 %v114
    %v294 = vunpack.c.l.b16 %v115
    %v295 = vunpack.c.h.b16 %v115
    %v296 = vunpack.c.l.b16 %v116
    %v297 = vunpack.c.h.b16 %v116
    %v298 = vunpack.c.l.b16 %v117
    %v299 = vunpack.c.h.b16 %v117
    %v300 = vunpack.c.l.b16 %v118
    %v301 = vunpack.c.h.b16 %v118
    %v302 = vunpack.c.l.b16 %v119
    %v303 = vunpack.c.h.b16 %v119
    %v304 = vunpack.c.l.b16 %v120
    %v305 = vunpack.c.h.b16 %v120
    %v306 = vunpack.c.l.b16 %v121
    %v307 = vunpack.c.h.b16 %v121
    %v308 = vunpack.c.l.b16 %v122
    %v309 = vunpack.c.h.b16 %v122
    %v310 = vunpack.c.l.b16 %v123
    %v311 = vunpack.c.h.b16 %v123
    %v312 = vunpack.c.l.b16 %v124
    %v313 = vunpack.c.h.b16 %v124
    %v314 = vunpack.c.l.b16 %v125
    %v315 = vunpack.c.h.b16 %v125
    %v316 = vunpack.c.l.b16 %v126
    %v317 = vunpack.c.h.b16 %v126
    %v318 = vunpack.c.l.b16 %v127
    %v319 = vunpack.c.h.b16 %v127
    %v320 = vunpack.c.l.b16 %v128
    %v321 = vunpack.c.h.b16 %v128
    %v322 = vunpack.c.l.b16 %v129
    %v323 = vunpack.c.h.b16 %v129
    %v324 = vunpack.c.l.b16 %v130
    %v325 = vunpack.c.h.b16 %v130
    %v326 = vunpack.c.l.b16 %v131
    %v327 = vunpack.c.h.b16 %v131
    %v328 = vunpack.c.l.b16 %v132
    %v329 = vunpack.c.h.b16 %v132
    %v330 = vunpack.c.l.b16 %v133
    %v331 = vunpack.c.h.b16 %v133
    %v332 = vunpack.c.l.b16 %v134
    %v333 = vunpack.c.h.b16 %v134
    %v334 = vunpack.c.l.b16 %v135
    %v335 = vunpack.c.h.b16 %v135
    %v336 = vunpack.c.l.b16 %v136
    %v337 = vunpack.c.h.b16 %v136
    %v338 = vunpack.c.l.b16 %v137
    %v339 = vunpack.c.h.b16 %v137
    %v340 = vunpack.c.l.b16 %v138
    %v341 = vunpack.c.h.b16 %v138
    %v342 = vunpack.c.l.b16 %v139
    %v343 = vunpack.c.h.b16 %v139
    %v344 = vunpack.c.l.b16 %v140
    %v345 = vunpack.c.h.b16 %v140
    %v346 = vunpack.c.l.b16 %v141
    %v347 = vunpack.c.h.b16 %v141
    %v348 = vunpack.c.l.b16 %v142
    %v349 = vunpack.c.h.b16 %v142
    %v350 = vunpack.c.l.b16 %v143
    %v351 = vunpack.c.h.b16 %v143
    %v352 = vpack.c.b16 %v226, %v224
    %v353 = vpack.c.b16 %v227, %v225
    %v354 = vpack.c.b16 %v230, %v228
    %v355 = vpack.c.b16 %v231, %v229
    %v356 = vpack.c.b16 %v234, %v232
    %v357 = vpack.c.b16 %v235, %v233
    %v358 = vpack.c.b16 %v238, %v236
    %v359 = vpack.c.b16 %v239, %v237
    %v360 = vpack.c.b16 %v242, %v240
    %v361 = vpack.c.b16 %v243, %v241
    %v362 = vpack.c.b16 %v246, %v244
    %v363 = vpack.c.b16 %v247, %v245
    %v364 = vpack.c.b16 %v250, %v248
    %v365 = vpack.c.b16 %v251, %v249
    %v366 = vpack.c.b16 %v254, %v252
    %v367 = vpack.c.b16 %v255, %v253
    %v368 = vpack.c.b16 %v258, %v256
    %v369 = vpack.c.b16 %v259, %v257
    %v370 = vpack.c.b16 %v262, %v260
    %v371 = vpack.c.b16 %v263, %v261
    %v372 = vpack.c.b16 %v266, %v264
    %v373 = vpack.c.b16 %v267, %v265
    %v374 = vpack.c.b16 %v270, %v268
    %v375 = vpack.c.b16 %v271, %v269
    %v376 = vpack.c.b16 %v274, %v272
    %v377 = vpack.c.b16 %v275, %v273
    %v378 = vpack.c.b16 %v278, %v276
    %v379 = vpack.c.b16 %v279, %v277
    %v380 = vpack.c.b16 %v282, %v280
    %v381 = vpack.c.b16 %v283, %v281
    %v382 = vpack.c.b16 %v286, %v284
    %v383 = vpack.c.b16 %v287, %v285
    %v384 = vpack.c.b16 %v290, %v288
    %v385 = vpack.c.b16 %v291, %v289
    %v386 = vpack.c.b16 %v294, %v292
    %v387 = vpack.c.b16 %v295, %v293
    %v388 = vpack.c.b16 %v298, %v296
    %v389 = vpack.c.b16 %v299, %v297
    %v390 = vpack.c.b16 %v302, %v300
    %v391 = vpack.c.b16 %v303, %v301
    %v392 = vpack.c.b16 %v306, %v304
    %v393 = vpack.c.b16 %v307, %v305
    %v394 = vpack.c.b16 %v310, %v308
    %v395 = vpack.c.b16 %v311, %v309
    %v396 = vpack.c.b16 %v314, %v312
    %v397 = vpack.c.b16 %v315, %v313
    %v398 = vpack.c.b16 %v318, %v316
    %v399 = vpack.c.b16 %v319, %v317
    %v400 = vpack.c.b16 %v322, %v320
    %v401 = vpack.c.b16 %v323, %v321
    %v402 = vpack.c.b16 %v326, %v324
    %v403 = vpack.c.b16 %v327, %v325
    %v404 = vpack.c.b16 %v330, %v328
    %v405 = vpack.c.b16 %v331, %v329
    %v406 = vpack.c.b16 %v334, %v332
    %v407 = vpack.c.b16 %v335, %v333
    %v408 = vpack.c.b16 %v338, %v336
    %v409 = vpack.c.b16 %v339, %v337
    %v410 = vpack.c.b16 %v342, %v340
    %v411 = vpack.c.b16 %v343, %v341
    %v412 = vpack.c.b16 %v346, %v344
    %v413 = vpack.c.b16 %v347, %v345
    %v414 = vpack.c.b16 %v350, %v348
    %v415 = vpack.c.b16 %v351, %v349
    %480 = vmatprep.subr.bf16.mxu0 %v353
    %481 = vmatpush1.bf16.msra.mxu0 %v352
    %482 = vmatprep.subr.bf16.mxu0 %v355
    %483 = vmatpush1.bf16.msra.mxu0 %v354
    %484 = vmatprep.subr.bf16.mxu0 %v357
    %485 = vmatpush1.bf16.msra.mxu0 %v356
    %486 = vmatprep.subr.bf16.mxu0 %v359
    %487 = vmatpush1.bf16.msra.mxu0 %v358
    %488 = vmatprep.subr.bf16.mxu0 %v361
    %489 = vmatpush1.bf16.msra.mxu0 %v360
    %490 = vmatprep.subr.bf16.mxu0 %v363
    %491 = vmatpush1.bf16.msra.mxu0 %v362
    %492 = vmatprep.subr.bf16.mxu0 %v365
    %493 = vmatpush1.bf16.msra.mxu0 %v364
    %494 = vmatprep.subr.bf16.mxu0 %v367
    %495 = vmatpush1.bf16.msra.mxu0 %v366
    %496 = vmatprep.subr.bf16.mxu0 %v369
    %497 = vmatpush1.bf16.msra.mxu0 %v368
    %498 = vmatprep.subr.bf16.mxu0 %v371
    %499 = vmatpush1.bf16.msra.mxu0 %v370
    %500 = vmatprep.subr.bf16.mxu0 %v373
    %501 = vmatpush1.bf16.msra.mxu0 %v372
    %502 = vmatprep.subr.bf16.mxu0 %v375
    %503 = vmatpush1.bf16.msra.mxu0 %v374
    %504 = vmatprep.subr.bf16.mxu0 %v377
    %505 = vmatpush1.bf16.msra.mxu0 %v376
    %506 = vmatprep.subr.bf16.mxu0 %v379
    %507 = vmatpush1.bf16.msra.mxu0 %v378
    %508 = vmatprep.subr.bf16.mxu0 %v381
    %509 = vmatpush1.bf16.msra.mxu0 %v380
    %510 = vmatprep.subr.bf16.mxu0 %v383
    %511 = vmatpush1.bf16.msra.mxu0 %v382
    %512 = vmatprep.mubr.bf16.mxu0 %v146
    %513 = vmatmul.mubr.bf16.gmra.mrb[0].mxu0 %v145
    %v514 = vpop.f32.mrb[0].mxu0
    %v515 = vadd.f32 %v153, %v514
    %v516 = vpop.f32.mrb[0].mxu0
    %v517 = vadd.f32 %v157, %v516
    %v518 = vpop.f32.mrb[0].mxu0
    %v519 = vpop.f32.mrb[0].mxu0
    %520 = vdwg.mxu0
    %521 = vmatprep.subr.bf16.mxu0 %v385
    %522 = vmatpush1.bf16.msra.mxu0 %v384
    %523 = vmatprep.subr.bf16.mxu0 %v387
    %524 = vmatpush1.bf16.msra.mxu0 %v386
    %525 = vmatprep.subr.bf16.mxu0 %v389
    %526 = vmatpush1.bf16.msra.mxu0 %v388
    %527 = vmatprep.subr.bf16.mxu0 %v391
    %528 = vmatpush1.bf16.msra.mxu0 %v390
    %529 = vmatprep.subr.bf16.mxu0 %v393
    %530 = vmatpush1.bf16.msra.mxu0 %v392
    %531 = vmatprep.subr.bf16.mxu0 %v395
    %532 = vmatpush1.bf16.msra.mxu0 %v394
    %533 = vmatprep.subr.bf16.mxu0 %v397
    %534 = vmatpush1.bf16.msra.mxu0 %v396
    %535 = vmatprep.subr.bf16.mxu0 %v399
    %536 = vmatpush1.bf16.msra.mxu0 %v398
    %537 = vmatprep.subr.bf16.mxu0 %v401
    %538 = vmatpush1.bf16.msra.mxu0 %v400
    %539 = vmatprep.subr.bf16.mxu0 %v403
    %540 = vmatpush1.bf16.msra.mxu0 %v402
    %541 = vmatprep.subr.bf16.mxu0 %v405
    %542 = vmatpush1.bf16.msra.mxu0 %v404
    %543 = vmatprep.subr.bf16.mxu0 %v407
    %544 = vmatpush1.bf16.msra.mxu0 %v406
    %545 = vmatprep.subr.bf16.mxu0 %v409
    %546 = vmatpush1.bf16.msra.mxu0 %v408
    %547 = vmatprep.subr.bf16.mxu0 %v411
    %548 = vmatpush1.bf16.msra.mxu0 %v410
    %549 = vmatprep.subr.bf16.mxu0 %v413
    %550 = vmatpush1.bf16.msra.mxu0 %v412
    %551 = vmatprep.subr.bf16.mxu0 %v415
    %552 = vmatpush1.bf16.msra.mxu0 %v414
    %553 = vmatprep.mubr.bf16.mxu0 %v148
    %554 = vmatmul.mubr.bf16.gmra.mrb[0].mxu0 %v147
    %v555 = vpop.f32.mrb[0].mxu0
    %v556 = vadd.f32 %v515, %v555
    %v557 = vpop.f32.mrb[0].mxu0
    %v558 = vadd.f32 %v517, %v557
    %v559 = vpop.f32.mrb[0].mxu0
    %v560 = vpop.f32.mrb[0].mxu0
    %561 = vdwg.mxu0
    %v562 = vmax.f32 %v556, 0.0
    %v563 = vmax.f32 %v558, 0.0
    %v564 = vld [vmem:[%s3] sm:$0xf]
    %v565 = vld [vmem:[%s3 + $0x4] sm:$0xf]
    %v566 = vld [vmem:[%s3 + $0x8] sm:$0xf]
    %v567 = vld [vmem:[%s3 + $0xc] sm:$0xf]
    %v568 = vld [vmem:[%s3 + $0x10] sm:$0xf]
    %v569 = vld [vmem:[%s3 + $0x14] sm:$0xf]
    %v570 = vld [vmem:[%s3 + $0x18] sm:$0xf]
    %v571 = vld [vmem:[%s3 + $0x1c] sm:$0xf]
    %v572 = vld [vmem:[%s3 + $0x20] sm:$0xf]
    %v573 = vld [vmem:[%s3 + $0x24] sm:$0xf]
    %v574 = vld [vmem:[%s3 + $0x28] sm:$0xf]
    %v575 = vld [vmem:[%s3 + $0x2c] sm:$0xf]
    %v576 = vld [vmem:[%s3 + $0x30] sm:$0xf]
    %v577 = vld [vmem:[%s3 + $0x34] sm:$0xf]
    %v578 = vld [vmem:[%s3 + $0x38] sm:$0xf]
    %v579 = vld [vmem:[%s3 + $0x3c] sm:$0xf]
    %v580 = vld [vmem:[%s3 + $0x40] sm:$0xf]
    %v581 = vld [vmem:[%s3 + $0x44] sm:$0xf]
    %v582 = vld [vmem:[%s3 + $0x48] sm:$0xf]
    %v583 = vld [vmem:[%s3 + $0x4c] sm:$0xf]
    %v584 = vld [vmem:[%s3 + $0x50] sm:$0xf]
    %v585 = vld [vmem:[%s3 + $0x54] sm:$0xf]
    %v586 = vld [vmem:[%s3 + $0x58] sm:$0xf]
    %v587 = vld [vmem:[%s3 + $0x5c] sm:$0xf]
    %v588 = vld [vmem:[%s3 + $0x60] sm:$0xf]
    %v589 = vld [vmem:[%s3 + $0x64] sm:$0xf]
    %v590 = vld [vmem:[%s3 + $0x68] sm:$0xf]
    %v591 = vld [vmem:[%s3 + $0x6c] sm:$0xf]
    %v592 = vld [vmem:[%s3 + $0x70] sm:$0xf]
    %v593 = vld [vmem:[%s3 + $0x74] sm:$0xf]
    %v594 = vld [vmem:[%s3 + $0x78] sm:$0xf]
    %v595 = vld [vmem:[%s3 + $0x7c] sm:$0xf]
    %v596 = vld [vmem:[#allocation5 + $0x2] sm:$0x1]
    %v597 = vpack.c.bf16 %v562, %v562
    %v598 = vpack.c.bf16 %v563, %v563
    %v600 = vlaneseq
    %v601 = vshrl.u32 %v600, 7
    %v602 = vsub.s32 0, %v601
    %v603 = vrot.slane %v596, %v602
    %v637 = vunpack.c.l.b16 %v564
    %v638 = vunpack.c.l.b16 %v565
    %v639 = vunpack.c.l.b16 %v566
    %v640 = vunpack.c.l.b16 %v567
    %v641 = vunpack.c.l.b16 %v568
    %v642 = vunpack.c.l.b16 %v569
    %v643 = vunpack.c.l.b16 %v570
    %v644 = vunpack.c.l.b16 %v571
    %v645 = vunpack.c.l.b16 %v572
    %v646 = vunpack.c.l.b16 %v573
    %v647 = vunpack.c.l.b16 %v574
    %v648 = vunpack.c.l.b16 %v575
    %v649 = vunpack.c.l.b16 %v576
    %v650 = vunpack.c.l.b16 %v577
    %v651 = vunpack.c.l.b16 %v578
    %v652 = vunpack.c.l.b16 %v579
    %v653 = vunpack.c.l.b16 %v580
    %v654 = vunpack.c.l.b16 %v581
    %v655 = vunpack.c.l.b16 %v582
    %v656 = vunpack.c.l.b16 %v583
    %v657 = vunpack.c.l.b16 %v584
    %v658 = vunpack.c.l.b16 %v585
    %v659 = vunpack.c.l.b16 %v586
    %v660 = vunpack.c.l.b16 %v587
    %v661 = vunpack.c.l.b16 %v588
    %v662 = vunpack.c.l.b16 %v589
    %v663 = vunpack.c.l.b16 %v590
    %v664 = vunpack.c.l.b16 %v591
    %v665 = vunpack.c.l.b16 %v592
    %v666 = vunpack.c.l.b16 %v593
    %v667 = vunpack.c.l.b16 %v594
    %v668 = vunpack.c.l.b16 %v595
    %v669 = vpack.c.b16 %v638, %v637
    %v670 = vpack.c.b16 %v640, %v639
    %v671 = vpack.c.b16 %v642, %v641
    %v672 = vpack.c.b16 %v644, %v643
    %v673 = vpack.c.b16 %v646, %v645
    %v674 = vpack.c.b16 %v648, %v647
    %v675 = vpack.c.b16 %v650, %v649
    %v676 = vpack.c.b16 %v652, %v651
    %v677 = vpack.c.b16 %v654, %v653
    %v678 = vpack.c.b16 %v656, %v655
    %v679 = vpack.c.b16 %v658, %v657
    %v680 = vpack.c.b16 %v660, %v659
    %v681 = vpack.c.b16 %v662, %v661
    %v682 = vpack.c.b16 %v664, %v663
    %v683 = vpack.c.b16 %v666, %v665
    %v684 = vpack.c.b16 %v668, %v667
    %701 = vmatprep.subr.bf16.mxu0 0
    %702 = vmatpush1.bf16.msra.mxu0 %v669
    %703 = vmatprep.subr.bf16.mxu0 0
    %704 = vmatpush1.bf16.msra.mxu0 %v670
    %705 = vmatprep.subr.bf16.mxu0 0
    %706 = vmatpush1.bf16.msra.mxu0 %v671
    %707 = vmatprep.subr.bf16.mxu0 0
    %708 = vmatpush1.bf16.msra.mxu0 %v672
    %709 = vmatprep.subr.bf16.mxu0 0
    %710 = vmatpush1.bf16.msra.mxu0 %v673
    %711 = vmatprep.subr.bf16.mxu0 0
    %712 = vmatpush1.bf16.msra.mxu0 %v674
    %713 = vmatprep.subr.bf16.mxu0 0
    %714 = vmatpush1.bf16.msra.mxu0 %v675
    %715 = vmatprep.subr.bf16.mxu0 0
    %716 = vmatpush1.bf16.msra.mxu0 %v676
    %717 = vmatprep.subr.bf16.mxu0 0
    %718 = vmatpush1.bf16.msra.mxu0 %v677
    %719 = vmatprep.subr.bf16.mxu0 0
    %720 = vmatpush1.bf16.msra.mxu0 %v678
    %721 = vmatprep.subr.bf16.mxu0 0
    %722 = vmatpush1.bf16.msra.mxu0 %v679
    %723 = vmatprep.subr.bf16.mxu0 0
    %724 = vmatpush1.bf16.msra.mxu0 %v680
    %725 = vmatprep.subr.bf16.mxu0 0
    %726 = vmatpush1.bf16.msra.mxu0 %v681
    %727 = vmatprep.subr.bf16.mxu0 0
    %728 = vmatpush1.bf16.msra.mxu0 %v682
    %729 = vmatprep.subr.bf16.mxu0 0
    %730 = vmatpush1.bf16.msra.mxu0 %v683
    %731 = vmatprep.subr.bf16.mxu0 0
    %732 = vmatpush1.bf16.msra.mxu0 %v684
    %733 = vmatprep.mubr.bf16.mxu0 %v598
    %734 = vmatmul.mubr.bf16.gmra.mrb[0].mxu0 %v597
    %v735 = vpop.f32.mrb[0].mxu0
    %v736 = vadd.f32 %v603, %v735
    %v737 = vpop.f32.mrb[0].mxu0
    %v738 = vpop.f32.mrb[0].mxu0
    %v739 = vpop.f32.mrb[0].mxu0
    %740 = vdwg.mxu0
    %v741 = vmax.f32 %v736, 0.0
    %v742 = vld [vmem:[%s4] sm:$0xf]
    %v743 = vld [vmem:[%s4 + $0x4] sm:$0xf]
    %v744 = vld [vmem:[%s4 + $0x8] sm:$0xf]
    %v745 = vld [vmem:[%s4 + $0xc] sm:$0xf]
    %v746 = vld [vmem:[%s4 + $0x10] sm:$0xf]
    %v747 = vld [vmem:[%s4 + $0x14] sm:$0xf]
    %v748 = vld [vmem:[%s4 + $0x18] sm:$0xf]
    %v749 = vld [vmem:[%s4 + $0x1c] sm:$0xf]
    %v750 = vld [vmem:[%s4 + $0x20] sm:$0xf]
    %v751 = vld [vmem:[%s4 + $0x24] sm:$0xf]
    %v752 = vld [vmem:[%s4 + $0x28] sm:$0xf]
    %v753 = vld [vmem:[%s4 + $0x2c] sm:$0xf]
    %v754 = vld [vmem:[%s4 + $0x30] sm:$0xf]
    %v755 = vld [vmem:[%s4 + $0x34] sm:$0xf]
    %v756 = vld [vmem:[%s4 + $0x38] sm:$0xf]
    %v757 = vld [vmem:[%s4 + $0x3c] sm:$0xf]
    %v758 = vld [vmem:[#allocation5 + $0x3] sm:$0x1]
    %v759 = vpack.c.bf16 %v741, %v741
    %v761 = vlaneseq
    %v762 = vshrl.u32 %v761, 7
    %v763 = vsub.s32 0, %v762
    %v764 = vrot.slane %v758, %v763
    %v782 = vunpack.c.l.b16 %v742
    %v783 = vunpack.c.l.b16 %v743
    %v784 = vunpack.c.l.b16 %v744
    %v785 = vunpack.c.l.b16 %v745
    %v786 = vunpack.c.l.b16 %v746
    %v787 = vunpack.c.l.b16 %v747
    %v788 = vunpack.c.l.b16 %v748
    %v789 = vunpack.c.l.b16 %v749
    %v790 = vunpack.c.l.b16 %v750
    %v791 = vunpack.c.l.b16 %v751
    %v792 = vunpack.c.l.b16 %v752
    %v793 = vunpack.c.l.b16 %v753
    %v794 = vunpack.c.l.b16 %v754
    %v795 = vunpack.c.l.b16 %v755
    %v796 = vunpack.c.l.b16 %v756
    %v797 = vunpack.c.l.b16 %v757
    %v798 = vpack.c.b16 %v783, %v782
    %v799 = vpack.c.b16 %v785, %v784
    %v800 = vpack.c.b16 %v787, %v786
    %v801 = vpack.c.b16 %v789, %v788
    %v802 = vpack.c.b16 %v791, %v790
    %v803 = vpack.c.b16 %v793, %v792
    %v804 = vpack.c.b16 %v795, %v794
    %v805 = vpack.c.b16 %v797, %v796
    %814 = vmatprep.subr.bf16.mxu0 0
    %815 = vmatpush1.bf16.msra.mxu0 %v798
    %816 = vmatprep.subr.bf16.mxu0 0
    %817 = vmatpush1.bf16.msra.mxu0 %v799
    %818 = vmatprep.subr.bf16.mxu0 0
    %819 = vmatpush1.bf16.msra.mxu0 %v800
    %820 = vmatprep.subr.bf16.mxu0 0
    %821 = vmatpush1.bf16.msra.mxu0 %v801
    %822 = vmatprep.subr.bf16.mxu0 0
    %823 = vmatpush1.bf16.msra.mxu0 %v802
    %824 = vmatprep.subr.bf16.mxu0 0
    %825 = vmatpush1.bf16.msra.mxu0 %v803
    %826 = vmatprep.subr.bf16.mxu0 0
    %827 = vmatpush1.bf16.msra.mxu0 %v804
    %828 = vmatprep.subr.bf16.mxu0 0
    %829 = vmatpush1.bf16.msra.mxu0 %v805
    %830 = vmatprep.subr.bf16.mxu0 0
    %831 = vmatpush1.bf16.msra.mxu0 0
    %832 = vmatprep.subr.bf16.mxu0 0
    %833 = vmatpush1.bf16.msra.mxu0 0
    %834 = vmatprep.subr.bf16.mxu0 0
    %835 = vmatpush1.bf16.msra.mxu0 0
    %836 = vmatprep.subr.bf16.mxu0 0
    %837 = vmatpush1.bf16.msra.mxu0 0
    %838 = vmatprep.subr.bf16.mxu0 0
    %839 = vmatpush1.bf16.msra.mxu0 0
    %840 = vmatprep.subr.bf16.mxu0 0
    %841 = vmatpush1.bf16.msra.mxu0 0
    %842 = vmatprep.subr.bf16.mxu0 0
    %843 = vmatpush1.bf16.msra.mxu0 0
    %844 = vmatprep.subr.bf16.mxu0 0
    %845 = vmatpush1.bf16.msra.mxu0 0
    %846 = vmatprep.mubr.bf16.mxu0 0
    %847 = vmatmul.mubr.bf16.gmra.mrb[0].mxu0 %v759
    %v848 = vpop.f32.mrb[0].mxu0
    %v849 = vadd.f32 %v764, %v848
    %v850 = vpop.f32.mrb[0].mxu0
    %v851 = vpop.f32.mrb[0].mxu0
    %v852 = vpop.f32.mrb[0].mxu0
    %853 = vdwg.mxu0
    %v854 = vmax.f32 %v849, 0.0
    %v855 = vld [vmem:[%s4 + $0x40] sm:$0xf]
    %v856 = vld [vmem:[%s4 + $0x44] sm:$0xf]
    %v857 = vld [vmem:[%s4 + $0x48] sm:$0xf]
    %v858 = vld [vmem:[%s4 + $0x4c] sm:$0xf]
    %v859 = vld [vmem:[%s4 + $0x50] sm:$0xf]
    %v860 = vld [vmem:[%s4 + $0x54] sm:$0xf]
    %v861 = vld [vmem:[%s4 + $0x58] sm:$0xf]
    %v862 = vld [vmem:[%s4 + $0x5c] sm:$0xf]
    %v863 = vld [vmem:[#allocation5 + $0x4] sm:$0x1]
    %v864 = vpack.c.bf16 %v854, %v854
    %v866 = vlaneseq
    %v867 = vshrl.u32 %v866, 7
    %v868 = vsub.s32 0, %v867
    %v869 = vrot.slane %v863, %v868
    %v879 = vunpack.c.l.b16 %v855
    %v880 = vunpack.c.l.b16 %v856
    %v881 = vunpack.c.l.b16 %v857
    %v882 = vunpack.c.l.b16 %v858
    %v883 = vunpack.c.l.b16 %v859
    %v884 = vunpack.c.l.b16 %v860
    %v885 = vunpack.c.l.b16 %v861
    %v886 = vunpack.c.l.b16 %v862
    %v887 = vpack.c.b16 %v880, %v879
    %v888 = vpack.c.b16 %v882, %v881
    %v889 = vpack.c.b16 %v884, %v883
    %v890 = vpack.c.b16 %v886, %v885
    %vm895 = vcmask 523264
    %v897 = vsel %vm895, %v864, 0
    %899 = vmatprep.subr.bf16.mxu0 0
    %900 = vmatpush1.bf16.msra.mxu0 %v887
    %901 = vmatprep.subr.bf16.mxu0 0
    %902 = vmatpush1.bf16.msra.mxu0 %v888
    %903 = vmatprep.subr.bf16.mxu0 0
    %904 = vmatpush1.bf16.msra.mxu0 %v889
    %905 = vmatprep.subr.bf16.mxu0 0
    %906 = vmatpush1.bf16.msra.mxu0 %v890
    %907 = vmatprep.subr.bf16.mxu0 0
    %908 = vmatpush1.bf16.msra.mxu0 0
    %909 = vmatprep.subr.bf16.mxu0 0
    %910 = vmatpush1.bf16.msra.mxu0 0
    %911 = vmatprep.subr.bf16.mxu0 0
    %912 = vmatpush1.bf16.msra.mxu0 0
    %913 = vmatprep.subr.bf16.mxu0 0
    %914 = vmatpush1.bf16.msra.mxu0 0
    %915 = vmatprep.subr.bf16.mxu0 0
    %916 = vmatpush1.bf16.msra.mxu0 0
    %917 = vmatprep.subr.bf16.mxu0 0
    %918 = vmatpush1.bf16.msra.mxu0 0
    %919 = vmatprep.subr.bf16.mxu0 0
    %920 = vmatpush1.bf16.msra.mxu0 0
    %921 = vmatprep.subr.bf16.mxu0 0
    %922 = vmatpush1.bf16.msra.mxu0 0
    %923 = vmatprep.subr.bf16.mxu0 0
    %924 = vmatpush1.bf16.msra.mxu0 0
    %925 = vmatprep.subr.bf16.mxu0 0
    %926 = vmatpush1.bf16.msra.mxu0 0
    %927 = vmatprep.subr.bf16.mxu0 0
    %928 = vmatpush1.bf16.msra.mxu0 0
    %929 = vmatprep.subr.bf16.mxu0 0
    %930 = vmatpush1.bf16.msra.mxu0 0
    %931 = vmatprep.mubr.bf16.mxu0 0
    %932 = vmatmul.mubr.bf16.gmra.mrb[0].mxu0 %v897
    %v933 = vpop.f32.mrb[0].mxu0
    %v934 = vadd.f32 %v869, %v933
    %v935 = vpop.f32.mrb[0].mxu0
    %v936 = vpop.f32.mrb[0].mxu0
    %v937 = vpop.f32.mrb[0].mxu0
    %938 = vdwg.mxu0
    %v939 = vmax.f32 %v934, 0.0
    %v940 = vld [vmem:[%s3 + $0x80] sm:$0xf]
    %v941 = vld [vmem:[%s3 + $0x84] sm:$0xf]
    %v942 = vld [vmem:[%s3 + $0x88] sm:$0xf]
    %v943 = vld [vmem:[%s3 + $0x8c] sm:$0xf]
    %v944 = vld [vmem:[%s3 + $0x90] sm:$0xf]
    %v945 = vld [vmem:[%s3 + $0x94] sm:$0xf]
    %v946 = vld [vmem:[%s3 + $0x98] sm:$0xf]
    %v947 = vld [vmem:[%s3 + $0x9c] sm:$0xf]
    %v948 = vld [vmem:[#allocation5 + $0x5] sm:$0x1]
    %v949 = vpack.c.bf16 %v939, %v939
    %v951 = vlaneseq
    %v952 = vshrl.u32 %v951, 7
    %v953 = vsub.s32 0, %v952
    %v954 = vrot.slane %v948, %v953
    %v964 = vunpack.c.l.b16 %v940
    %v965 = vunpack.c.l.b16 %v941
    %v966 = vunpack.c.l.b16 %v942
    %v967 = vunpack.c.l.b16 %v943
    %v968 = vunpack.c.l.b16 %v944
    %v969 = vunpack.c.l.b16 %v945
    %v970 = vunpack.c.l.b16 %v946
    %v971 = vunpack.c.l.b16 %v947
    %v972 = vpack.c.b16 %v965, %v964
    %v973 = vpack.c.b16 %v967, %v966
    %v974 = vpack.c.b16 %v969, %v968
    %v975 = vpack.c.b16 %v971, %v970
    %v981 = vsel %vm895, %v949, 0
    %983 = vmatprep.subr.bf16.mxu0 0
    %984 = vmatpush1.bf16.msra.mxu0 %v972
    %985 = vmatprep.subr.bf16.mxu0 0
    %986 = vmatpush1.bf16.msra.mxu0 %v973
    %987 = vmatprep.subr.bf16.mxu0 0
    %988 = vmatpush1.bf16.msra.mxu0 %v974
    %989 = vmatprep.subr.bf16.mxu0 0
    %990 = vmatpush1.bf16.msra.mxu0 %v975
    %991 = vmatprep.subr.bf16.mxu0 0
    %992 = vmatpush1.bf16.msra.mxu0 0
    %993 = vmatprep.subr.bf16.mxu0 0
    %994 = vmatpush1.bf16.msra.mxu0 0
    %995 = vmatprep.subr.bf16.mxu0 0
    %996 = vmatpush1.bf16.msra.mxu0 0
    %997 = vmatprep.subr.bf16.mxu0 0
    %998 = vmatpush1.bf16.msra.mxu0 0
    %999 = vmatprep.subr.bf16.mxu0 0
    %1000 = vmatpush1.bf16.msra.mxu0 0
    %1001 = vmatprep.subr.bf16.mxu0 0
    %1002 = vmatpush1.bf16.msra.mxu0 0
    %1003 = vmatprep.subr.bf16.mxu0 0
    %1004 = vmatpush1.bf16.msra.mxu0 0
    %1005 = vmatprep.subr.bf16.mxu0 0
    %1006 = vmatpush1.bf16.msra.mxu0 0
    %1007 = vmatprep.subr.bf16.mxu0 0
    %1008 = vmatpush1.bf16.msra.mxu0 0
    %1009 = vmatprep.subr.bf16.mxu0 0
    %1010 = vmatpush1.bf16.msra.mxu0 0
    %1011 = vmatprep.subr.bf16.mxu0 0
    %1012 = vmatpush1.bf16.msra.mxu0 0
    %1013 = vmatprep.subr.bf16.mxu0 0
    %1014 = vmatpush1.bf16.msra.mxu0 0
    %1015 = vmatprep.mubr.bf16.mxu0 0
    %1016 = vmatmul.mubr.bf16.gmra.mrb[0].mxu0 %v981
    %v1017 = vpop.f32.mrb[0].mxu0
    %v1018 = vadd.f32 %v954, %v1017
    %v1019 = vpop.f32.mrb[0].mxu0
    %v1020 = vpop.f32.mrb[0].mxu0
    %v1021 = vpop.f32.mrb[0].mxu0
    %1022 = vdwg.mxu0
    %v1023 = vmax.f32 %v1018, 0.0
    %v1024 = vld [vmem:[#allocation7 + $0x200] sm:$0xff]
    %v1025 = vld [vmem:[#allocation7 + $0x208] sm:$0xff]
    %v1026 = vld [vmem:[#allocation7 + $0x210] sm:$0xff]
    %v1027 = vld [vmem:[#allocation7 + $0x218] sm:$0xff]
    %v1028 = vld [vmem:[#allocation7 + $0x220] sm:$0xff]
    %v1029 = vld [vmem:[#allocation7 + $0x228] sm:$0xff]
    %v1030 = vld [vmem:[#allocation7 + $0x230] sm:$0xff]
    %v1031 = vld [vmem:[#allocation7 + $0x238] sm:$0xff]
    %v1032 = vld [vmem:[#allocation7 + $0x240] sm:$0xff]
    %v1033 = vld [vmem:[#allocation7 + $0x248] sm:$0xff]
    %v1034 = vld [vmem:[#allocation7 + $0x250] sm:$0xff]
    %v1035 = vld [vmem:[#allocation7 + $0x258] sm:$0xff]
    %v1036 = vld [vmem:[#allocation7 + $0x260] sm:$0xff]
    %v1037 = vld [vmem:[#allocation7 + $0x268] sm:$0xff]
    %v1038 = vld [vmem:[#allocation7 + $0x270] sm:$0xff]
    %v1039 = vld [vmem:[#allocation7 + $0x278] sm:$0xff]
    %v1040 = vld [vmem:[#allocation5 + $0x6] sm:$0x3]
    %v1041 = vpack.c.bf16 %v1023, %v1023
    %v1043 = vlaneseq
    %v1044 = vshrl.u32 %v1043, 7
    %v1045 = vsub.s32 0, %v1044
    %v1046 = vrot.slane %v1040, %v1045
    %v1047 = vlaneseq
    %v1048 = vshrl.u32 %v1047, 7
    %v1049 = vsub.s32 1, %v1048
    %v1050 = vrot.slane %v1040, %v1049
    %v1069 = vunpack.c.l.b16 %v1024
    %v1070 = vunpack.c.h.b16 %v1024
    %v1071 = vunpack.c.l.b16 %v1025
    %v1072 = vunpack.c.h.b16 %v1025
    %v1073 = vunpack.c.l.b16 %v1026
    %v1074 = vunpack.c.h.b16 %v1026
    %v1075 = vunpack.c.l.b16 %v1027
    %v1076 = vunpack.c.h.b16 %v1027
    %v1077 = vunpack.c.l.b16 %v1028
    %v1078 = vunpack.c.h.b16 %v1028
    %v1079 = vunpack.c.l.b16 %v1029
    %v1080 = vunpack.c.h.b16 %v1029
    %v1081 = vunpack.c.l.b16 %v1030
    %v1082 = vunpack.c.h.b16 %v1030
    %v1083 = vunpack.c.l.b16 %v1031
    %v1084 = vunpack.c.h.b16 %v1031
    %v1085 = vunpack.c.l.b16 %v1032
    %v1086 = vunpack.c.h.b16 %v1032
    %v1087 = vunpack.c.l.b16 %v1033
    %v1088 = vunpack.c.h.b16 %v1033
    %v1089 = vunpack.c.l.b16 %v1034
    %v1090 = vunpack.c.h.b16 %v1034
    %v1091 = vunpack.c.l.b16 %v1035
    %v1092 = vunpack.c.h.b16 %v1035
    %v1093 = vunpack.c.l.b16 %v1036
    %v1094 = vunpack.c.h.b16 %v1036
    %v1095 = vunpack.c.l.b16 %v1037
    %v1096 = vunpack.c.h.b16 %v1037
    %v1097 = vunpack.c.l.b16 %v1038
    %v1098 = vunpack.c.h.b16 %v1038
    %v1099 = vunpack.c.l.b16 %v1039
    %v1100 = vunpack.c.h.b16 %v1039
    %v1101 = vpack.c.b16 %v1071, %v1069
    %v1102 = vpack.c.b16 %v1072, %v1070
    %v1103 = vpack.c.b16 %v1075, %v1073
    %v1104 = vpack.c.b16 %v1076, %v1074
    %v1105 = vpack.c.b16 %v1079, %v1077
    %v1106 = vpack.c.b16 %v1080, %v1078
    %v1107 = vpack.c.b16 %v1083, %v1081
    %v1108 = vpack.c.b16 %v1084, %v1082
    %v1109 = vpack.c.b16 %v1087, %v1085
    %v1110 = vpack.c.b16 %v1088, %v1086
    %v1111 = vpack.c.b16 %v1091, %v1089
    %v1112 = vpack.c.b16 %v1092, %v1090
    %v1113 = vpack.c.b16 %v1095, %v1093
    %v1114 = vpack.c.b16 %v1096, %v1094
    %v1115 = vpack.c.b16 %v1099, %v1097
    %v1116 = vpack.c.b16 %v1100, %v1098
    %1133 = vmatprep.subr.bf16.mxu0 %v1102
    %1134 = vmatpush1.bf16.msra.mxu0 %v1101
    %1135 = vmatprep.subr.bf16.mxu0 %v1104
    %1136 = vmatpush1.bf16.msra.mxu0 %v1103
    %1137 = vmatprep.subr.bf16.mxu0 %v1106
    %1138 = vmatpush1.bf16.msra.mxu0 %v1105
    %1139 = vmatprep.subr.bf16.mxu0 %v1108
    %1140 = vmatpush1.bf16.msra.mxu0 %v1107
    %1141 = vmatprep.subr.bf16.mxu0 %v1110
    %1142 = vmatpush1.bf16.msra.mxu0 %v1109
    %1143 = vmatprep.subr.bf16.mxu0 %v1112
    %1144 = vmatpush1.bf16.msra.mxu0 %v1111
    %1145 = vmatprep.subr.bf16.mxu0 %v1114
    %1146 = vmatpush1.bf16.msra.mxu0 %v1113
    %1147 = vmatprep.subr.bf16.mxu0 %v1116
    %1148 = vmatpush1.bf16.msra.mxu0 %v1115
    %1149 = vmatprep.subr.bf16.mxu0 0
    %1150 = vmatpush1.bf16.msra.mxu0 0
    %1151 = vmatprep.subr.bf16.mxu0 0
    %1152 = vmatpush1.bf16.msra.mxu0 0
    %1153 = vmatprep.subr.bf16.mxu0 0
    %1154 = vmatpush1.bf16.msra.mxu0 0
    %1155 = vmatprep.subr.bf16.mxu0 0
    %1156 = vmatpush1.bf16.msra.mxu0 0
    %1157 = vmatprep.subr.bf16.mxu0 0
    %1158 = vmatpush1.bf16.msra.mxu0 0
    %1159 = vmatprep.subr.bf16.mxu0 0
    %1160 = vmatpush1.bf16.msra.mxu0 0
    %1161 = vmatprep.subr.bf16.mxu0 0
    %1162 = vmatpush1.bf16.msra.mxu0 0
    %1163 = vmatprep.subr.bf16.mxu0 0
    %1164 = vmatpush1.bf16.msra.mxu0 0
    %1165 = vmatprep.mubr.bf16.mxu0 0
    %1166 = vmatmul.mubr.bf16.gmra.mrb[0].mxu0 %v1041
    %v1167 = vpop.f32.mrb[0].mxu0
    %v1168 = vadd.f32 %v1046, %v1167
    %v1169 = vpop.f32.mrb[0].mxu0
    %v1170 = vadd.f32 %v1050, %v1169
    %v1171 = vpop.f32.mrb[0].mxu0
    %v1172 = vpop.f32.mrb[0].mxu0
    %1173 = vdwg.mxu0
    %v1174 = vmax.f32 %v1168, 0.0
    %v1175 = vmax.f32 %v1170, 0.0
    %v1176 = vld [vmem:[#allocation8] sm:$0xff]
    %v1177 = vld [vmem:[#allocation8 + $0x8] sm:$0xff]
    %v1178 = vld [vmem:[#allocation8 + $0x10] sm:$0xff]
    %v1179 = vld [vmem:[#allocation8 + $0x18] sm:$0xff]
    %v1180 = vld [vmem:[#allocation8 + $0x20] sm:$0xff]
    %v1181 = vld [vmem:[#allocation8 + $0x28] sm:$0xff]
    %v1182 = vld [vmem:[#allocation8 + $0x30] sm:$0xff]
    %v1183 = vld [vmem:[#allocation8 + $0x38] sm:$0xff]
    %v1184 = vld [vmem:[#allocation8 + $0x40] sm:$0xff]
    %v1185 = vld [vmem:[#allocation8 + $0x48] sm:$0xff]
    %v1186 = vld [vmem:[#allocation8 + $0x50] sm:$0xff]
    %v1187 = vld [vmem:[#allocation8 + $0x58] sm:$0xff]
    %v1188 = vld [vmem:[#allocation8 + $0x60] sm:$0xff]
    %v1189 = vld [vmem:[#allocation8 + $0x68] sm:$0xff]
    %v1190 = vld [vmem:[#allocation8 + $0x70] sm:$0xff]
    %v1191 = vld [vmem:[#allocation8 + $0x78] sm:$0xff]
    %v1192 = vld [vmem:[#allocation8 + $0x80] sm:$0xff]
    %v1193 = vld [vmem:[#allocation8 + $0x88] sm:$0xff]
    %v1194 = vld [vmem:[#allocation8 + $0x90] sm:$0xff]
    %v1195 = vld [vmem:[#allocation8 + $0x98] sm:$0xff]
    %v1196 = vld [vmem:[#allocation8 + $0xa0] sm:$0xff]
    %v1197 = vld [vmem:[#allocation8 + $0xa8] sm:$0xff]
    %v1198 = vld [vmem:[#allocation8 + $0xb0] sm:$0xff]
    %v1199 = vld [vmem:[#allocation8 + $0xb8] sm:$0xff]
    %v1200 = vld [vmem:[#allocation8 + $0xc0] sm:$0xff]
    %v1201 = vld [vmem:[#allocation8 + $0xc8] sm:$0xff]
    %v1202 = vld [vmem:[#allocation8 + $0xd0] sm:$0xff]
    %v1203 = vld [vmem:[#allocation8 + $0xd8] sm:$0xff]
    %v1204 = vld [vmem:[#allocation8 + $0xe0] sm:$0xff]
    %v1205 = vld [vmem:[#allocation8 + $0xe8] sm:$0xff]
    %v1206 = vld [vmem:[#allocation8 + $0xf0] sm:$0xff]
    %v1207 = vld [vmem:[#allocation8 + $0xf8] sm:$0xff]
    %v1208 = vld [vmem:[#allocation8 + $0x100] sm:$0xff]
    %v1209 = vld [vmem:[#allocation8 + $0x108] sm:$0xff]
    %v1210 = vld [vmem:[#allocation8 + $0x110] sm:$0xff]
    %v1211 = vld [vmem:[#allocation8 + $0x118] sm:$0xff]
    %v1212 = vld [vmem:[#allocation8 + $0x120] sm:$0xff]
    %v1213 = vld [vmem:[#allocation8 + $0x128] sm:$0xff]
    %v1214 = vld [vmem:[#allocation8 + $0x130] sm:$0xff]
    %v1215 = vld [vmem:[#allocation8 + $0x138] sm:$0xff]
    %v1216 = vld [vmem:[#allocation8 + $0x140] sm:$0xff]
    %v1217 = vld [vmem:[#allocation8 + $0x148] sm:$0xff]
    %v1218 = vld [vmem:[#allocation8 + $0x150] sm:$0xff]
    %v1219 = vld [vmem:[#allocation8 + $0x158] sm:$0xff]
    %v1220 = vld [vmem:[#allocation8 + $0x160] sm:$0xff]
    %v1221 = vld [vmem:[#allocation8 + $0x168] sm:$0xff]
    %v1222 = vld [vmem:[#allocation8 + $0x170] sm:$0xff]
    %v1223 = vld [vmem:[#allocation8 + $0x178] sm:$0xff]
    %v1224 = vld [vmem:[#allocation8 + $0x180] sm:$0xff]
    %v1225 = vld [vmem:[#allocation8 + $0x188] sm:$0xff]
    %v1226 = vld [vmem:[#allocation8 + $0x190] sm:$0xff]
    %v1227 = vld [vmem:[#allocation8 + $0x198] sm:$0xff]
    %v1228 = vld [vmem:[#allocation8 + $0x1a0] sm:$0xff]
    %v1229 = vld [vmem:[#allocation8 + $0x1a8] sm:$0xff]
    %v1230 = vld [vmem:[#allocation8 + $0x1b0] sm:$0xff]
    %v1231 = vld [vmem:[#allocation8 + $0x1b8] sm:$0xff]
    %v1232 = vld [vmem:[#allocation8 + $0x1c0] sm:$0xff]
    %v1233 = vld [vmem:[#allocation8 + $0x1c8] sm:$0xff]
    %v1234 = vld [vmem:[#allocation8 + $0x1d0] sm:$0xff]
    %v1235 = vld [vmem:[#allocation8 + $0x1d8] sm:$0xff]
    %v1236 = vld [vmem:[#allocation8 + $0x1e0] sm:$0xff]
    %v1237 = vld [vmem:[#allocation8 + $0x1e8] sm:$0xff]
    %v1238 = vld [vmem:[#allocation8 + $0x1f0] sm:$0xff]
    %v1239 = vld [vmem:[#allocation8 + $0x1f8] sm:$0xff]
    %v1240 = vld [vmem:[#allocation5 + $0x8] sm:$0xf]
    %v1241 = vpack.c.bf16 %v1174, %v1174
    %v1242 = vpack.c.bf16 %v1175, %v1175
    %v1244 = vlaneseq
    %v1245 = vshrl.u32 %v1244, 7
    %v1246 = vsub.s32 0, %v1245
    %v1247 = vrot.slane %v1240, %v1246
    %v1248 = vlaneseq
    %v1249 = vshrl.u32 %v1248, 7
    %v1250 = vsub.s32 1, %v1249
    %v1251 = vrot.slane %v1240, %v1250
    %v1252 = vlaneseq
    %v1253 = vshrl.u32 %v1252, 7
    %v1254 = vsub.s32 2, %v1253
    %v1255 = vrot.slane %v1240, %v1254
    %v1256 = vlaneseq
    %v1257 = vshrl.u32 %v1256, 7
    %v1258 = vsub.s32 3, %v1257
    %v1259 = vrot.slane %v1240, %v1258
    %v1328 = vunpack.c.l.b16 %v1176
    %v1329 = vunpack.c.h.b16 %v1176
    %v1330 = vunpack.c.l.b16 %v1177
    %v1331 = vunpack.c.h.b16 %v1177
    %v1332 = vunpack.c.l.b16 %v1178
    %v1333 = vunpack.c.h.b16 %v1178
    %v1334 = vunpack.c.l.b16 %v1179
    %v1335 = vunpack.c.h.b16 %v1179
    %v1336 = vunpack.c.l.b16 %v1180
    %v1337 = vunpack.c.h.b16 %v1180
    %v1338 = vunpack.c.l.b16 %v1181
    %v1339 = vunpack.c.h.b16 %v1181
    %v1340 = vunpack.c.l.b16 %v1182
    %v1341 = vunpack.c.h.b16 %v1182
    %v1342 = vunpack.c.l.b16 %v1183
    %v1343 = vunpack.c.h.b16 %v1183
    %v1344 = vunpack.c.l.b16 %v1184
    %v1345 = vunpack.c.h.b16 %v1184
    %v1346 = vunpack.c.l.b16 %v1185
    %v1347 = vunpack.c.h.b16 %v1185
    %v1348 = vunpack.c.l.b16 %v1186
    %v1349 = vunpack.c.h.b16 %v1186
    %v1350 = vunpack.c.l.b16 %v1187
    %v1351 = vunpack.c.h.b16 %v1187
    %v1352 = vunpack.c.l.b16 %v1188
    %v1353 = vunpack.c.h.b16 %v1188
    %v1354 = vunpack.c.l.b16 %v1189
    %v1355 = vunpack.c.h.b16 %v1189
    %v1356 = vunpack.c.l.b16 %v1190
    %v1357 = vunpack.c.h.b16 %v1190
    %v1358 = vunpack.c.l.b16 %v1191
    %v1359 = vunpack.c.h.b16 %v1191
    %v1360 = vunpack.c.l.b16 %v1192
    %v1361 = vunpack.c.h.b16 %v1192
    %v1362 = vunpack.c.l.b16 %v1193
    %v1363 = vunpack.c.h.b16 %v1193
    %v1364 = vunpack.c.l.b16 %v1194
    %v1365 = vunpack.c.h.b16 %v1194
    %v1366 = vunpack.c.l.b16 %v1195
    %v1367 = vunpack.c.h.b16 %v1195
    %v1368 = vunpack.c.l.b16 %v1196
    %v1369 = vunpack.c.h.b16 %v1196
    %v1370 = vunpack.c.l.b16 %v1197
    %v1371 = vunpack.c.h.b16 %v1197
    %v1372 = vunpack.c.l.b16 %v1198
    %v1373 = vunpack.c.h.b16 %v1198
    %v1374 = vunpack.c.l.b16 %v1199
    %v1375 = vunpack.c.h.b16 %v1199
    %v1376 = vunpack.c.l.b16 %v1200
    %v1377 = vunpack.c.h.b16 %v1200
    %v1378 = vunpack.c.l.b16 %v1201
    %v1379 = vunpack.c.h.b16 %v1201
    %v1380 = vunpack.c.l.b16 %v1202
    %v1381 = vunpack.c.h.b16 %v1202
    %v1382 = vunpack.c.l.b16 %v1203
    %v1383 = vunpack.c.h.b16 %v1203
    %v1384 = vunpack.c.l.b16 %v1204
    %v1385 = vunpack.c.h.b16 %v1204
    %v1386 = vunpack.c.l.b16 %v1205
    %v1387 = vunpack.c.h.b16 %v1205
    %v1388 = vunpack.c.l.b16 %v1206
    %v1389 = vunpack.c.h.b16 %v1206
    %v1390 = vunpack.c.l.b16 %v1207
    %v1391 = vunpack.c.h.b16 %v1207
    %v1392 = vunpack.c.l.b16 %v1208
    %v1393 = vunpack.c.h.b16 %v1208
    %v1394 = vunpack.c.l.b16 %v1209
    %v1395 = vunpack.c.h.b16 %v1209
    %v1396 = vunpack.c.l.b16 %v1210
    %v1397 = vunpack.c.h.b16 %v1210
    %v1398 = vunpack.c.l.b16 %v1211
    %v1399 = vunpack.c.h.b16 %v1211
    %v1400 = vunpack.c.l.b16 %v1212
    %v1401 = vunpack.c.h.b16 %v1212
    %v1402 = vunpack.c.l.b16 %v1213
    %v1403 = vunpack.c.h.b16 %v1213
    %v1404 = vunpack.c.l.b16 %v1214
    %v1405 = vunpack.c.h.b16 %v1214
    %v1406 = vunpack.c.l.b16 %v1215
    %v1407 = vunpack.c.h.b16 %v1215
    %v1408 = vunpack.c.l.b16 %v1216
    %v1409 = vunpack.c.h.b16 %v1216
    %v1410 = vunpack.c.l.b16 %v1217
    %v1411 = vunpack.c.h.b16 %v1217
    %v1412 = vunpack.c.l.b16 %v1218
    %v1413 = vunpack.c.h.b16 %v1218
    %v1414 = vunpack.c.l.b16 %v1219
    %v1415 = vunpack.c.h.b16 %v1219
    %v1416 = vunpack.c.l.b16 %v1220
    %v1417 = vunpack.c.h.b16 %v1220
    %v1418 = vunpack.c.l.b16 %v1221
    %v1419 = vunpack.c.h.b16 %v1221
    %v1420 = vunpack.c.l.b16 %v1222
    %v1421 = vunpack.c.h.b16 %v1222
    %v1422 = vunpack.c.l.b16 %v1223
    %v1423 = vunpack.c.h.b16 %v1223
    %v1424 = vunpack.c.l.b16 %v1224
    %v1425 = vunpack.c.h.b16 %v1224
    %v1426 = vunpack.c.l.b16 %v1225
    %v1427 = vunpack.c.h.b16 %v1225
    %v1428 = vunpack.c.l.b16 %v1226
    %v1429 = vunpack.c.h.b16 %v1226
    %v1430 = vunpack.c.l.b16 %v1227
    %v1431 = vunpack.c.h.b16 %v1227
    %v1432 = vunpack.c.l.b16 %v1228
    %v1433 = vunpack.c.h.b16 %v1228
    %v1434 = vunpack.c.l.b16 %v1229
    %v1435 = vunpack.c.h.b16 %v1229
    %v1436 = vunpack.c.l.b16 %v1230
    %v1437 = vunpack.c.h.b16 %v1230
    %v1438 = vunpack.c.l.b16 %v1231
    %v1439 = vunpack.c.h.b16 %v1231
    %v1440 = vunpack.c.l.b16 %v1232
    %v1441 = vunpack.c.h.b16 %v1232
    %v1442 = vunpack.c.l.b16 %v1233
    %v1443 = vunpack.c.h.b16 %v1233
    %v1444 = vunpack.c.l.b16 %v1234
    %v1445 = vunpack.c.h.b16 %v1234
    %v1446 = vunpack.c.l.b16 %v1235
    %v1447 = vunpack.c.h.b16 %v1235
    %v1448 = vunpack.c.l.b16 %v1236
    %v1449 = vunpack.c.h.b16 %v1236
    %v1450 = vunpack.c.l.b16 %v1237
    %v1451 = vunpack.c.h.b16 %v1237
    %v1452 = vunpack.c.l.b16 %v1238
    %v1453 = vunpack.c.h.b16 %v1238
    %v1454 = vunpack.c.l.b16 %v1239
    %v1455 = vunpack.c.h.b16 %v1239
    %v1456 = vpack.c.b16 %v1332, %v1328
    %v1457 = vpack.c.b16 %v1333, %v1329
    %v1458 = vpack.c.b16 %v1334, %v1330
    %v1459 = vpack.c.b16 %v1335, %v1331
    %v1460 = vpack.c.b16 %v1340, %v1336
    %v1461 = vpack.c.b16 %v1341, %v1337
    %v1462 = vpack.c.b16 %v1342, %v1338
    %v1463 = vpack.c.b16 %v1343, %v1339
    %v1464 = vpack.c.b16 %v1348, %v1344
    %v1465 = vpack.c.b16 %v1349, %v1345
    %v1466 = vpack.c.b16 %v1350, %v1346
    %v1467 = vpack.c.b16 %v1351, %v1347
    %v1468 = vpack.c.b16 %v1356, %v1352
    %v1469 = vpack.c.b16 %v1357, %v1353
    %v1470 = vpack.c.b16 %v1358, %v1354
    %v1471 = vpack.c.b16 %v1359, %v1355
    %v1472 = vpack.c.b16 %v1364, %v1360
    %v1473 = vpack.c.b16 %v1365, %v1361
    %v1474 = vpack.c.b16 %v1366, %v1362
    %v1475 = vpack.c.b16 %v1367, %v1363
    %v1476 = vpack.c.b16 %v1372, %v1368
    %v1477 = vpack.c.b16 %v1373, %v1369
    %v1478 = vpack.c.b16 %v1374, %v1370
    %v1479 = vpack.c.b16 %v1375, %v1371
    %v1480 = vpack.c.b16 %v1380, %v1376
    %v1481 = vpack.c.b16 %v1381, %v1377
    %v1482 = vpack.c.b16 %v1382, %v1378
    %v1483 = vpack.c.b16 %v1383, %v1379
    %v1484 = vpack.c.b16 %v1388, %v1384
    %v1485 = vpack.c.b16 %v1389, %v1385
    %v1486 = vpack.c.b16 %v1390, %v1386
    %v1487 = vpack.c.b16 %v1391, %v1387
    %v1488 = vpack.c.b16 %v1396, %v1392
    %v1489 = vpack.c.b16 %v1397, %v1393
    %v1490 = vpack.c.b16 %v1398, %v1394
    %v1491 = vpack.c.b16 %v1399, %v1395
    %v1492 = vpack.c.b16 %v1404, %v1400
    %v1493 = vpack.c.b16 %v1405, %v1401
    %v1494 = vpack.c.b16 %v1406, %v1402
    %v1495 = vpack.c.b16 %v1407, %v1403
    %v1496 = vpack.c.b16 %v1412, %v1408
    %v1497 = vpack.c.b16 %v1413, %v1409
    %v1498 = vpack.c.b16 %v1414, %v1410
    %v1499 = vpack.c.b16 %v1415, %v1411
    %v1500 = vpack.c.b16 %v1420, %v1416
    %v1501 = vpack.c.b16 %v1421, %v1417
    %v1502 = vpack.c.b16 %v1422, %v1418
    %v1503 = vpack.c.b16 %v1423, %v1419
    %v1504 = vpack.c.b16 %v1428, %v1424
    %v1505 = vpack.c.b16 %v1429, %v1425
    %v1506 = vpack.c.b16 %v1430, %v1426
    %v1507 = vpack.c.b16 %v1431, %v1427
    %v1508 = vpack.c.b16 %v1436, %v1432
    %v1509 = vpack.c.b16 %v1437, %v1433
    %v1510 = vpack.c.b16 %v1438, %v1434
    %v1511 = vpack.c.b16 %v1439, %v1435
    %v1512 = vpack.c.b16 %v1444, %v1440
    %v1513 = vpack.c.b16 %v1445, %v1441
    %v1514 = vpack.c.b16 %v1446, %v1442
    %v1515 = vpack.c.b16 %v1447, %v1443
    %v1516 = vpack.c.b16 %v1452, %v1448
    %v1517 = vpack.c.b16 %v1453, %v1449
    %v1518 = vpack.c.b16 %v1454, %v1450
    %v1519 = vpack.c.b16 %v1455, %v1451
    %1584 = vmatprep.subr.bf16.mxu0 %v1457
    %1585 = vmatpush1.bf16.msra.mxu0 %v1456
    %1586 = vmatprep.subr.bf16.mxu0 %v1461
    %1587 = vmatpush1.bf16.msra.mxu0 %v1460
    %1588 = vmatprep.subr.bf16.mxu0 %v1465
    %1589 = vmatpush1.bf16.msra.mxu0 %v1464
    %1590 = vmatprep.subr.bf16.mxu0 %v1469
    %1591 = vmatpush1.bf16.msra.mxu0 %v1468
    %1592 = vmatprep.subr.bf16.mxu0 %v1473
    %1593 = vmatpush1.bf16.msra.mxu0 %v1472
    %1594 = vmatprep.subr.bf16.mxu0 %v1477
    %1595 = vmatpush1.bf16.msra.mxu0 %v1476
    %1596 = vmatprep.subr.bf16.mxu0 %v1481
    %1597 = vmatpush1.bf16.msra.mxu0 %v1480
    %1598 = vmatprep.subr.bf16.mxu0 %v1485
    %1599 = vmatpush1.bf16.msra.mxu0 %v1484
    %1600 = vmatprep.subr.bf16.mxu0 %v1489
    %1601 = vmatpush1.bf16.msra.mxu0 %v1488
    %1602 = vmatprep.subr.bf16.mxu0 %v1493
    %1603 = vmatpush1.bf16.msra.mxu0 %v1492
    %1604 = vmatprep.subr.bf16.mxu0 %v1497
    %1605 = vmatpush1.bf16.msra.mxu0 %v1496
    %1606 = vmatprep.subr.bf16.mxu0 %v1501
    %1607 = vmatpush1.bf16.msra.mxu0 %v1500
    %1608 = vmatprep.subr.bf16.mxu0 %v1505
    %1609 = vmatpush1.bf16.msra.mxu0 %v1504
    %1610 = vmatprep.subr.bf16.mxu0 %v1509
    %1611 = vmatpush1.bf16.msra.mxu0 %v1508
    %1612 = vmatprep.subr.bf16.mxu0 %v1513
    %1613 = vmatpush1.bf16.msra.mxu0 %v1512
    %1614 = vmatprep.subr.bf16.mxu0 %v1517
    %1615 = vmatpush1.bf16.msra.mxu0 %v1516
    %1616 = vmatprep.mubr.bf16.mxu0 %v1242
    %1617 = vmatmul.mubr.bf16.gmra.mrb[0].mxu0 %v1241
    %v1618 = vpop.f32.mrb[0].mxu0
    %v1619 = vadd.f32 %v1247, %v1618
    %v1620 = vpop.f32.mrb[0].mxu0
    %v1621 = vadd.f32 %v1251, %v1620
    %v1622 = vpop.f32.mrb[0].mxu0
    %v1623 = vpop.f32.mrb[0].mxu0
    %1624 = vdwg.mxu0
    %1625 = vmatprep.subr.bf16.mxu0 %v1459
    %1626 = vmatpush1.bf16.msra.mxu0 %v1458
    %1627 = vmatprep.subr.bf16.mxu0 %v1463
    %1628 = vmatpush1.bf16.msra.mxu0 %v1462
    %1629 = vmatprep.subr.bf16.mxu0 %v1467
    %1630 = vmatpush1.bf16.msra.mxu0 %v1466
    %1631 = vmatprep.subr.bf16.mxu0 %v1471
    %1632 = vmatpush1.bf16.msra.mxu0 %v1470
    %1633 = vmatprep.subr.bf16.mxu0 %v1475
    %1634 = vmatpush1.bf16.msra.mxu0 %v1474
    %1635 = vmatprep.subr.bf16.mxu0 %v1479
    %1636 = vmatpush1.bf16.msra.mxu0 %v1478
    %1637 = vmatprep.subr.bf16.mxu0 %v1483
    %1638 = vmatpush1.bf16.msra.mxu0 %v1482
    %1639 = vmatprep.subr.bf16.mxu0 %v1487
    %1640 = vmatpush1.bf16.msra.mxu0 %v1486
    %1641 = vmatprep.subr.bf16.mxu0 %v1491
    %1642 = vmatpush1.bf16.msra.mxu0 %v1490
    %1643 = vmatprep.subr.bf16.mxu0 %v1495
    %1644 = vmatpush1.bf16.msra.mxu0 %v1494
    %1645 = vmatprep.subr.bf16.mxu0 %v1499
    %1646 = vmatpush1.bf16.msra.mxu0 %v1498
    %1647 = vmatprep.subr.bf16.mxu0 %v1503
    %1648 = vmatpush1.bf16.msra.mxu0 %v1502
    %1649 = vmatprep.subr.bf16.mxu0 %v1507
    %1650 = vmatpush1.bf16.msra.mxu0 %v1506
    %1651 = vmatprep.subr.bf16.mxu0 %v1511
    %1652 = vmatpush1.bf16.msra.mxu0 %v1510
    %1653 = vmatprep.subr.bf16.mxu0 %v1515
    %1654 = vmatpush1.bf16.msra.mxu0 %v1514
    %1655 = vmatprep.subr.bf16.mxu0 %v1519
    %1656 = vmatpush1.bf16.msra.mxu0 %v1518
    %1657 = vmatprep.mubr.bf16.mxu0 %v1242
    %1658 = vmatmul.mubr.bf16.gmra.mrb[0].mxu0 %v1241
    %v1659 = vpop.f32.mrb[0].mxu0
    %v1660 = vadd.f32 %v1255, %v1659
    %v1661 = vpop.f32.mrb[0].mxu0
    %v1662 = vadd.f32 %v1259, %v1661
    %v1663 = vpop.f32.mrb[0].mxu0
    %v1664 = vpop.f32.mrb[0].mxu0
    %1665 = vdwg.mxu0
    %v1666 = vand.u32 2147483647, %v1619
    %v1667 = vand.u32 2147483647, %v1621
    %v1668 = vand.u32 2147483647, %v1660
    %v1669 = vand.u32 2147483647, %v1662
    %v1670 = vsub.f32 0.0, %v1666
    %v1671 = vsub.f32 0.0, %v1667
    %v1672 = vsub.f32 0.0, %v1668
    %v1673 = vsub.f32 0.0, %v1669
    %v1674 = vmul.f32 %v1670, 1.442695
    %v1675 = vpow.pop %v1674
    %v1676 = vmul.f32 %v1671, 1.442695
    %v1677 = vpow.pop %v1676
    %v1678 = vmul.f32 %v1672, 1.442695
    %v1679 = vpow.pop %v1678
    %v1680 = vmul.f32 %v1673, 1.442695
    %v1681 = vpow.pop %v1680
    %v1682 = vadd.f32 %v1675, 1.0
    %v1683 = vadd.f32 %v1677, 1.0
    %v1684 = vadd.f32 %v1679, 1.0
    %v1685 = vadd.f32 %v1681, 1.0
    %v1686 = vrcp.pop %v1682
    %v1687 = vrcp.pop %v1683
    %v1688 = vrcp.pop %v1684
    %v1689 = vrcp.pop %v1685
    %vm1690 = vcmp.ge.f32.partialorder %v1619, 0.0
    %vm1691 = vcmp.ge.f32.partialorder %v1621, 0.0
    %vm1692 = vcmp.ge.f32.partialorder %v1660, 0.0
    %vm1693 = vcmp.ge.f32.partialorder %v1662, 0.0
    %v1694 = vmul.f32 %v1675, %v1686
    %v1695 = vmul.f32 %v1677, %v1687
    %v1696 = vmul.f32 %v1679, %v1688
    %v1697 = vmul.f32 %v1681, %v1689
    %v1698 = vsel %vm1690, %v1686, %v1694
    %v1699 = vsel %vm1691, %v1687, %v1695
    %v1700 = vsel %vm1692, %v1688, %v1696
    %v1701 = vsel %vm1693, %v1689, %v1697
    %1702 = vst [vmem:[#allocation10] sm:$0xff] %v1698
    %1703 = vst [vmem:[#allocation10 + $0x8] sm:$0xff] %v1699
    %1704 = vst [vmem:[#allocation10 + $0x10] sm:$0xff] %v1700
    %1705 = vst [vmem:[#allocation10 + $0x18] sm:$0xff] %v1701
    // Predicated region
    $region42: #{stacked_autoencoder_forward.1} parent=1 // pred_check
      _
    $region43: #{stacked_autoencoder_forward.1} parent=1 // pred_check_branch
      %1707 = sbr.rel (0) target = $region45
    $region44: #{stacked_autoencoder_forward.1} parent=1 // pred_region
      %s1709 = ssub.s32 512, 512
      %1710 = vsyncadd [#allocation4], %s1709
      %s1712 = sshll.u32 [#allocation10], 4
      %s1713 = int_to_ptr.vmem [resolvable:$true] %s1712
      %1715 = dma.vmem_to_hbm [thread:$0]  %s1713, 512, %s6, [#allocation4]
    $region45: #{stacked_autoencoder_forward.1} parent=1 // pred_fallthru
      _
    // Predicated region
    $region46: #{stacked_autoencoder_forward.1} parent=1 // pred_check
      _
    $region47: #{stacked_autoencoder_forward.1} parent=1 // pred_check_branch
      %1717 = sbr.rel (0) target = $region49
    $region48: #{stacked_autoencoder_forward.1} parent=1 // pred_region
      %1718 = dma.done [#allocation4], 512
    $region49: #{stacked_autoencoder_forward.1} parent=1 // pred_fallthru
      _
    %1719 = vsyncpa [#allocation3], 1
    %1720 = vsyncpa [#allocation6], 1
    %1721 = vsyncpa [#allocation9], 1
    %1722 = vsyncpa [#allocation4], 1

</llo_original>
